<compile_context>
chip_gen: v7x
topology: tpu7x:2x2x1
jax: 0.10.0
libtpu: 0.0.40
codegen_flags: <defaults>
</compile_context>

<pallas_src>
import math
from functools import partial

import jax
import jax.numpy as jnp
from jax import lax
from jax.experimental import pallas as pl
from jax.experimental.pallas import tpu as pltpu


def _kw_attention_kernel(x_ref, neg_ref, wqkv_ref, bqkv_ref, wo_ref, bo_ref,
                         gamma_ref, beta_ref, *out_and_scratch,
                         num_heads, hidden_size, seq_len, batch_block, eps, emit_attw):
    H, S, Bb, nh = hidden_size, seq_len, batch_block, num_heads
    hd = H // nh
    scale = 1.0 / math.sqrt(hd)
    cdt = wqkv_ref.dtype                           # MXU operand dtype (f32 or bf16)
    if emit_attw:
        out_ref, attw_ref, o_scratch = out_and_scratch
    else:
        out_ref, o_scratch = out_and_scratch
        attw_ref = None

    xf = x_ref[...]                                # (Bb*S, H) f32, lane-dense rows

    # Fused QKV projection: one (Bb*S,H) x (H,3H) MXU matmul, f32 accumulation + f32 bias.
    qkv = jnp.dot(xf.astype(cdt), wqkv_ref[...],
                  preferred_element_type=jnp.float32) + bqkv_ref[...]      # (Bb*S, 3H)
    qkv3 = qkv.reshape(Bb, S, 3 * H)               # leading-dim unflatten (layout-preserving)

    # Additive key-padding mask (f32, -1e30 / 0); broadcast hoisted out of the head loop.
    neg_b = jnp.broadcast_to(neg_ref[...], (Bb, S, S))                     # (Bb, S, S)

    w_sum = jnp.zeros((Bb, S, S), jnp.float32) if emit_attw else None
    for h in range(nh):                            # static unrolled loop over heads
        q = qkv3[:, :, 0 * H + h * hd:0 * H + (h + 1) * hd].astype(cdt)    # (Bb, S, hd)
        k = qkv3[:, :, 1 * H + h * hd:1 * H + (h + 1) * hd].astype(cdt)
        v = qkv3[:, :, 2 * H + h * hd:2 * H + (h + 1) * hd].astype(cdt)

        # Scores + softmax, all f32 (mask is added after the matmul so -1e30 never sees bf16).
        s = jnp.einsum("bqd,bkd->bqk", q, k,
                       preferred_element_type=jnp.float32) * scale + neg_b
        s = s - jnp.max(s, axis=-1, keepdims=True)
        p = jnp.exp(s)
        denom = jnp.sum(p, axis=-1, keepdims=True)
        r = pl.reciprocal(denom, approx=True)      # EUP slot (otherwise idle)
        r = r * (2.0 - denom * r)                  # one Newton step -> ~f32-exact
        p = p * r
        if emit_attw:
            w_sum = w_sum + p

        o = jnp.einsum("bqk,bkd->bqd", p.astype(cdt), v,
                       preferred_element_type=jnp.float32)                 # (Bb, S, hd) f32
        # Head concat: this head's columns of the (Bb*S, H) activation slab.
        o_scratch[:, h * hd:(h + 1) * hd] = o.reshape(Bb * S, hd).astype(o_scratch.dtype)

    # Single K=H output projection (restored head concat), f32 accumulation + f32 bias.
    attn_out = jnp.dot(o_scratch[...], wo_ref[...],
                       preferred_element_type=jnp.float32) + bo_ref[...]   # (Bb*S, H)

    # dropout (eval) -> identity; residual + LayerNorm over the lane dim, all f32.
    res = attn_out + xf
    mean = jnp.mean(res, axis=-1, keepdims=True)
    var = jnp.mean(jnp.square(res - mean), axis=-1, keepdims=True)
    y = (res - mean) * lax.rsqrt(var + eps)
    out_ref[...] = y * gamma_ref[...] + beta_ref[...]

    if emit_attw:                                  # head-averaged attention weights
        attw_ref[...] = (w_sum * (1.0 / nh)).reshape(Bb * S, S).astype(attw_ref.dtype)


def _choose_batch_block(B, S):
    """Largest divisor of B giving >=4 grid steps (fallback >=2, then B), keeping the flattened
    (Bb*S, .) blocks compatible with the (8,128) tiling rule."""
    def ok(bb):
        return B % bb == 0 and (bb == B or (bb * S) % 8 == 0)
    for min_steps in (4, 2):
        cands = [bb for bb in range(1, B + 1) if ok(bb) and B // bb >= min_steps]
        if cands:
            return max(cands)
    return B


def _default_vmem_limit_bytes():
    cap = 128 * 1024 * 1024
    try:
        cap = int(pltpu.get_tpu_info().vmem_capacity_bytes)
    except Exception:
        pass
    # ~half of physical VMEM: 64 MiB on v5e/v6e (128 MiB), 32 MiB on v7x (64 MiB).
    return max(32 * 1024 * 1024, min(64 * 1024 * 1024, cap // 2))


def keyword_attention(hidden_states, attention_mask, params, num_heads=4,
                      compute_dtype=jnp.bfloat16, batch_block=None, eps=1e-5,
                      return_attn_weights=True, attw_dtype=jnp.float32,
                      vmem_limit_bytes=None):
    """Fused MultiheadAttention(+key_padding_mask) + residual + LayerNorm (eval mode).

    hidden_states: (B, S, H) f32; attention_mask: (B, S), nonzero == padding key (excluded).
    compute_dtype: MXU operand dtype (bf16 default for v6e/v7x; use float32 for exact
    validation, or on v5e if profiling shows activation casts make it VALU-bound).
    All accumulation, softmax, masking and LayerNorm run in f32.
    """
    B, S, H = hidden_states.shape
    assert H % num_heads == 0, "hidden_size must be divisible by num_heads"
    if batch_block is None:
        batch_block = _choose_batch_block(B, S)
    assert B % batch_block == 0, "batch_block must divide B"
    Bb = batch_block
    nb = B // Bb
    if vmem_limit_bytes is None:
        vmem_limit_bytes = _default_vmem_limit_bytes()

    # Pre-transposed / pre-cast weights: no in-kernel .T; bf16 halves weight VMEM/HBM traffic.
    wqkv_t = jnp.asarray(params["in_proj_weight"], jnp.float32).T.astype(compute_dtype)   # (H,3H)
    wo_t = jnp.asarray(params["out_proj_weight"], jnp.float32).T.astype(compute_dtype)    # (H,H)
    bqkv = jnp.asarray(params["in_proj_bias"], jnp.float32).reshape(1, 3 * H)
    bo = jnp.asarray(params["out_proj_bias"], jnp.float32).reshape(1, H)
    gamma = jnp.asarray(params["ln_weight"], jnp.float32).reshape(1, H)
    beta = jnp.asarray(params["ln_bias"], jnp.float32).reshape(1, H)

    # Lane-dense input slab; additive key-padding mask precomputed in f32 (tiny, wrapper-side).
    xf = hidden_states.astype(jnp.float32).reshape(B * S, H)
    neg = jnp.where(attention_mask.astype(jnp.float32) > 0.5, -1e30, 0.0)
    neg = neg.astype(jnp.float32).reshape(B, 1, S)

    kernel = partial(_kw_attention_kernel, num_heads=num_heads, hidden_size=H,
                     seq_len=S, batch_block=Bb, eps=eps,
                     emit_attw=return_attn_weights)

    in_specs = [
        pl.BlockSpec((Bb * S, H), lambda b: (b, 0)),       # hidden_states slab
        pl.BlockSpec((Bb, 1, S), lambda b: (b, 0, 0)),     # additive key-padding mask
        pl.BlockSpec((H, 3 * H), lambda b: (0, 0)),        # Wqkv^T   (constant over grid)
        pl.BlockSpec((1, 3 * H), lambda b: (0, 0)),        # in_proj bias
        pl.BlockSpec((H, H), lambda b: (0, 0)),            # Wo^T     (constant over grid)
        pl.BlockSpec((1, H), lambda b: (0, 0)),            # out_proj bias
        pl.BlockSpec((1, H), lambda b: (0, 0)),            # LayerNorm gamma
        pl.BlockSpec((1, H), lambda b: (0, 0)),            # LayerNorm beta
    ]
    out_spec_y = pl.BlockSpec((Bb * S, H), lambda b: (b, 0))
    shape_y = jax.ShapeDtypeStruct((B * S, H), jnp.float32)
    if return_attn_weights:
        out_specs = (out_spec_y, pl.BlockSpec((Bb * S, S), lambda b: (b, 0)))
        out_shape = (shape_y, jax.ShapeDtypeStruct((B * S, S), attw_dtype))
    else:
        out_specs = out_spec_y
        out_shape = shape_y

    result = pl.pallas_call(
        kernel,
        out_shape=out_shape,
        grid_spec=pltpu.PrefetchScalarGridSpec(
            num_scalar_prefetch=0, grid=(nb,),
            in_specs=in_specs, out_specs=out_specs,
            scratch_shapes=[pltpu.VMEM((Bb * S, H), compute_dtype)]),   # head-concat buffer
        compiler_params=pltpu.CompilerParams(
            dimension_semantics=("parallel",),
            vmem_limit_bytes=vmem_limit_bytes),
    )(xf, neg, wqkv_t, bqkv, wo_t, bo, gamma, beta)

    if return_attn_weights:
        y, attw = result
        return y.reshape(B, S, H), attw.reshape(B, S, S)
    return result.reshape(B, S, H), None


def ref_keyword_attention(x, mask, params, num_heads=4):
    """Pure-JAX reference mirroring the PyTorch forward (eval mode)."""
    B, S, H = x.shape
    hd = H // num_heads
    qkv = x @ params["in_proj_weight"].T + params["in_proj_bias"]
    q, k, v = jnp.split(qkv, 3, axis=-1)
    split = lambda t: t.reshape(B, S, num_heads, hd).transpose(0, 2, 1, 3)
    q, k, v = split(q), split(k), split(v)
    s = jnp.einsum("bhqd,bhkd->bhqk", q, k) / math.sqrt(hd)
    s = s + jnp.where(mask[:, None, None, :] > 0.5, -1e30, 0.0)
    p = jax.nn.softmax(s, axis=-1)
    o = jnp.einsum("bhqk,bhkd->bhqd", p, v).transpose(0, 2, 1, 3).reshape(B, S, H)
    o = o @ params["out_proj_weight"].T + params["out_proj_bias"]
    res = o + x
    mu = res.mean(-1, keepdims=True)
    var = jnp.square(res - mu).mean(-1, keepdims=True)
    y = (res - mu) / jnp.sqrt(var + 1e-5)
    y = y * params["ln_weight"] + params["ln_bias"]
    return y, p.mean(axis=1)


if __name__ == "__main__":
    B, S, H, num_heads = 2, 8, 32, 4
    key = jax.random.PRNGKey(0)
    ks = jax.random.split(key, 8)

    x = jax.random.normal(ks[0], (B, S, H), jnp.float32)
    mask = (jax.random.uniform(ks[1], (B, S)) < 0.25).astype(jnp.float32)
    mask = mask.at[:, 0].set(0.0)      # keep >= 1 valid key per row (matches ref precondition)

    params = {
        "in_proj_weight": 0.05 * jax.random.normal(ks[2], (3 * H, H), jnp.float32),
        "in_proj_bias":   0.02 * jax.random.normal(ks[3], (3 * H,), jnp.float32),
        "out_proj_weight": 0.05 * jax.random.normal(ks[4], (H, H), jnp.float32),
        "out_proj_bias":  0.02 * jax.random.normal(ks[5], (H,), jnp.float32),
        "ln_weight": 1.0 + 0.1 * jax.random.normal(ks[6], (H,), jnp.float32),
        "ln_bias":        0.1 * jax.random.normal(ks[7], (H,), jnp.float32),
    }

    ref_out, ref_attw = ref_keyword_attention(x, mask, params, num_heads=num_heads)

    # (1) f32 MXU operands, default multi-step "parallel" grid -> near-exact validation.
    out, attw = keyword_attention(x, mask, params, num_heads=num_heads,
                                  compute_dtype=jnp.float32)
    out, attw = jax.block_until_ready((out, attw))
    assert out.shape == (B, S, H) and attw.shape == (B, S, S)
    assert jnp.allclose(out, ref_out, atol=1e-4, rtol=1e-4), "f32 output mismatch"
    assert jnp.allclose(attw, ref_attw, atol=1e-4, rtol=1e-3), "f32 attn weights mismatch"

    # (2) default bf16 MXU operands / f32 accumulation (v6e/v7x fast path), bf16 attw store.
    out_bf, attw_bf = keyword_attention(x, mask, params, num_heads=num_heads,
                                        attw_dtype=jnp.bfloat16)
    out_bf, attw_bf = jax.block_until_ready((out_bf, attw_bf))
    assert jnp.allclose(out_bf, ref_out, atol=3e-2, rtol=3e-2), "bf16 output mismatch"
    assert jnp.allclose(attw_bf.astype(jnp.float32), ref_attw, atol=2e-2, rtol=3e-2), \
        "bf16 attn weights mismatch"

    # (3) attention-weight output elided (biggest bandwidth lever on v5e).
    out_nw, attw_nw = keyword_attention(x, mask, params, num_heads=num_heads,
                                        return_attn_weights=False)
    out_nw = jax.block_until_ready(out_nw)
    assert attw_nw is None
    assert jnp.allclose(out_nw, ref_out, atol=3e-2, rtol=3e-2), "no-attw output mismatch"

    print("KERNEL_OK")
</pallas_src>

<mosaic_0001>
module attributes {stable_mosaic.version = 11 : i64} {
  func.func @_kw_attention_kernel(%arg0: i32, %arg1: memref<8x32xf32, #tpu.memory_space<vmem>>, %arg2: memref<1x1x8xf32, #tpu.memory_space<vmem>>, %arg3: memref<32x96xf32, #tpu.memory_space<vmem>>, %arg4: memref<1x96xf32, #tpu.memory_space<vmem>>, %arg5: memref<32x32xf32, #tpu.memory_space<vmem>>, %arg6: memref<1x32xf32, #tpu.memory_space<vmem>>, %arg7: memref<1x32xf32, #tpu.memory_space<vmem>>, %arg8: memref<1x32xf32, #tpu.memory_space<vmem>>, %arg9: memref<8x32xf32, #tpu.memory_space<vmem>>, %arg10: memref<8x8xf32, #tpu.memory_space<vmem>>, %arg11: memref<8x32xf32, #tpu.memory_space<vmem>>) attributes {dimension_semantics = [#tpu.dimension_semantics<parallel>], iteration_bounds = array<i64: 2>, scalar_prefetch = 0 : i64, scratch_operands = 1 : i64, tpu.core_type = #tpu.core_type<tc>, window_params = [{transform_indices = @transform_0, window_bounds = array<i64: 8, 32>}, {transform_indices = @transform_1, window_bounds = array<i64: 1, 1, 8>}, {pipeline_mode = #tpu.pipeline_mode<synchronous>, transform_indices = @transform_2, window_bounds = array<i64: 32, 96>}, {pipeline_mode = #tpu.pipeline_mode<synchronous>, transform_indices = @transform_3, window_bounds = array<i64: 1, 96>}, {pipeline_mode = #tpu.pipeline_mode<synchronous>, transform_indices = @transform_4, window_bounds = array<i64: 32, 32>}, {pipeline_mode = #tpu.pipeline_mode<synchronous>, transform_indices = @transform_5, window_bounds = array<i64: 1, 32>}, {pipeline_mode = #tpu.pipeline_mode<synchronous>, transform_indices = @transform_6, window_bounds = array<i64: 1, 32>}, {pipeline_mode = #tpu.pipeline_mode<synchronous>, transform_indices = @transform_7, window_bounds = array<i64: 1, 32>}, {transform_indices = @transform_8, window_bounds = array<i64: 8, 32>}, {transform_indices = @transform_9, window_bounds = array<i64: 8, 8>}]} {
    %c0 = arith.constant 0 : index
    %c0_0 = arith.constant 0 : index
    %0 = vector.load %arg1[%c0, %c0_0] : memref<8x32xf32, #tpu.memory_space<vmem>>, vector<8x32xf32>
    %c0_1 = arith.constant 0 : index
    %c0_2 = arith.constant 0 : index
    %1 = vector.load %arg3[%c0_1, %c0_2] : memref<32x96xf32, #tpu.memory_space<vmem>>, vector<32x96xf32>
    %cst = arith.constant dense<0.000000e+00> : vector<8x96xf32>
    %2 = tpu.matmul %0, %1, %cst {dimension_numbers = #tpu.dot_dimension_numbers<[1], [0], [0], [1], [0, 0, 1, 1], [], []>} : vector<8x32xf32>, vector<32x96xf32>, vector<8x96xf32> -> vector<8x96xf32>
    %c0_3 = arith.constant 0 : index
    %c0_4 = arith.constant 0 : index
    %3 = vector.load %arg4[%c0_3, %c0_4] : memref<1x96xf32, #tpu.memory_space<vmem>>, vector<1x96xf32>
    %4 = vector.broadcast %3 : vector<1x96xf32> to vector<8x96xf32>
    %5 = arith.addf %2, %4 : vector<8x96xf32>
    %6 = vector.shape_cast %5 : vector<8x96xf32> to vector<1x8x96xf32>
    %c0_5 = arith.constant 0 : index
    %c0_6 = arith.constant 0 : index
    %c0_7 = arith.constant 0 : index
    %7 = vector.load %arg2[%c0_5, %c0_6, %c0_7] : memref<1x1x8xf32, #tpu.memory_space<vmem>>, vector<1x1x8xf32>
    %8 = vector.shape_cast %7 : vector<1x1x8xf32> to vector<1x1x8xf32>
    %9 = vector.broadcast %8 : vector<1x1x8xf32> to vector<1x8x8xf32>
    %cst_8 = arith.constant 0.000000e+00 : f32
    %10 = vector.broadcast %cst_8 : f32 to vector<1x8x8xf32>
    %11 = vector.extract_strided_slice %6 {offsets = [0, 0, 0], sizes = [1, 8, 8], strides = [1, 1, 1]} : vector<1x8x96xf32> to vector<1x8x8xf32>
    %12 = vector.extract_strided_slice %6 {offsets = [0, 0, 32], sizes = [1, 8, 8], strides = [1, 1, 1]} : vector<1x8x96xf32> to vector<1x8x8xf32>
    %13 = vector.extract_strided_slice %6 {offsets = [0, 0, 64], sizes = [1, 8, 8], strides = [1, 1, 1]} : vector<1x8x96xf32> to vector<1x8x8xf32>
    "tpu.trace_start"() <{level = 10 : i32, message = "bqd,bkd->bqk"}> : () -> ()
    %cst_9 = arith.constant dense<0.000000e+00> : vector<1x8x8xf32>
    %14 = tpu.matmul %11, %12, %cst_9 {dimension_numbers = #tpu.dot_dimension_numbers<[2], [2], [1], [1], [0, 0, 0, 1, 1, 1], [0], [0]>} : vector<1x8x8xf32>, vector<1x8x8xf32>, vector<1x8x8xf32> -> vector<1x8x8xf32>
    "tpu.trace_stop"() : () -> ()
    %cst_10 = arith.constant 0.353553385 : f32
    %15 = vector.broadcast %cst_10 : f32 to vector<1x8x8xf32>
    %16 = arith.mulf %14, %15 : vector<1x8x8xf32>
    %17 = arith.addf %16, %9 : vector<1x8x8xf32>
    %cst_11 = arith.constant dense<0xFF800000> : vector<1x8xf32>
    %18 = vector.multi_reduction <maximumf>, %17, %cst_11 [2] : vector<1x8x8xf32> to vector<1x8xf32>
    %19 = vector.shape_cast %18 : vector<1x8xf32> to vector<1x8x1xf32>
    %20 = vector.broadcast %19 : vector<1x8x1xf32> to vector<1x8x8xf32>
    %21 = arith.subf %17, %20 : vector<1x8x8xf32>
    %22 = math.exp %21 : vector<1x8x8xf32>
    %cst_12 = arith.constant dense<0.000000e+00> : vector<1x8xf32>
    %23 = vector.multi_reduction <add>, %22, %cst_12 [2] : vector<1x8x8xf32> to vector<1x8xf32>
    %24 = vector.shape_cast %23 : vector<1x8xf32> to vector<1x8x1xf32>
    %25 = tpu.reciprocal %24 {approx = true} : vector<1x8x1xf32> -> vector<1x8x1xf32>
    %26 = arith.mulf %24, %25 : vector<1x8x1xf32>
    %cst_13 = arith.constant 2.000000e+00 : f32
    %27 = vector.broadcast %cst_13 : f32 to vector<1x8x1xf32>
    %28 = arith.subf %27, %26 : vector<1x8x1xf32>
    %29 = arith.mulf %25, %28 : vector<1x8x1xf32>
    %30 = vector.broadcast %29 : vector<1x8x1xf32> to vector<1x8x8xf32>
    %31 = arith.mulf %22, %30 : vector<1x8x8xf32>
    %32 = arith.addf %10, %31 : vector<1x8x8xf32>
    "tpu.trace_start"() <{level = 10 : i32, message = "bqk,bkd->bqd"}> : () -> ()
    %cst_14 = arith.constant dense<0.000000e+00> : vector<1x8x8xf32>
    %33 = tpu.matmul %31, %13, %cst_14 {dimension_numbers = #tpu.dot_dimension_numbers<[2], [1], [1], [2], [0, 0, 0, 1, 1, 2], [0], [0]>} : vector<1x8x8xf32>, vector<1x8x8xf32>, vector<1x8x8xf32> -> vector<1x8x8xf32>
    "tpu.trace_stop"() : () -> ()
    %34 = vector.shape_cast %33 : vector<1x8x8xf32> to vector<8x8xf32>
    %c0_15 = arith.constant 0 : index
    %c0_16 = arith.constant 0 : index
    %35 = vector.load %arg11[%c0_15, %c0_16] : memref<8x32xf32, #tpu.memory_space<vmem>>, vector<8x8xf32>
    tpu.vector_store %arg11[%c0_15, %c0_16], %34 {strides = array<i32>} : memref<8x32xf32, #tpu.memory_space<vmem>>, vector<8x8xf32>,
    %36 = vector.extract_strided_slice %6 {offsets = [0, 0, 8], sizes = [1, 8, 8], strides = [1, 1, 1]} : vector<1x8x96xf32> to vector<1x8x8xf32>
    %37 = vector.extract_strided_slice %6 {offsets = [0, 0, 40], sizes = [1, 8, 8], strides = [1, 1, 1]} : vector<1x8x96xf32> to vector<1x8x8xf32>
    %38 = vector.extract_strided_slice %6 {offsets = [0, 0, 72], sizes = [1, 8, 8], strides = [1, 1, 1]} : vector<1x8x96xf32> to vector<1x8x8xf32>
    "tpu.trace_start"() <{level = 10 : i32, message = "bqd,bkd->bqk"}> : () -> ()
    %cst_17 = arith.constant dense<0.000000e+00> : vector<1x8x8xf32>
    %39 = tpu.matmul %36, %37, %cst_17 {dimension_numbers = #tpu.dot_dimension_numbers<[2], [2], [1], [1], [0, 0, 0, 1, 1, 1], [0], [0]>} : vector<1x8x8xf32>, vector<1x8x8xf32>, vector<1x8x8xf32> -> vector<1x8x8xf32>
    "tpu.trace_stop"() : () -> ()
    %cst_18 = arith.constant 0.353553385 : f32
    %40 = vector.broadcast %cst_18 : f32 to vector<1x8x8xf32>
    %41 = arith.mulf %39, %40 : vector<1x8x8xf32>
    %42 = arith.addf %41, %9 : vector<1x8x8xf32>
    %cst_19 = arith.constant dense<0xFF800000> : vector<1x8xf32>
    %43 = vector.multi_reduction <maximumf>, %42, %cst_19 [2] : vector<1x8x8xf32> to vector<1x8xf32>
    %44 = vector.shape_cast %43 : vector<1x8xf32> to vector<1x8x1xf32>
    %45 = vector.broadcast %44 : vector<1x8x1xf32> to vector<1x8x8xf32>
    %46 = arith.subf %42, %45 : vector<1x8x8xf32>
    %47 = math.exp %46 : vector<1x8x8xf32>
    %cst_20 = arith.constant dense<0.000000e+00> : vector<1x8xf32>
    %48 = vector.multi_reduction <add>, %47, %cst_20 [2] : vector<1x8x8xf32> to vector<1x8xf32>
    %49 = vector.shape_cast %48 : vector<1x8xf32> to vector<1x8x1xf32>
    %50 = tpu.reciprocal %49 {approx = true} : vector<1x8x1xf32> -> vector<1x8x1xf32>
    %51 = arith.mulf %49, %50 : vector<1x8x1xf32>
    %cst_21 = arith.constant 2.000000e+00 : f32
    %52 = vector.broadcast %cst_21 : f32 to vector<1x8x1xf32>
    %53 = arith.subf %52, %51 : vector<1x8x1xf32>
    %54 = arith.mulf %50, %53 : vector<1x8x1xf32>
    %55 = vector.broadcast %54 : vector<1x8x1xf32> to vector<1x8x8xf32>
    %56 = arith.mulf %47, %55 : vector<1x8x8xf32>
    %57 = arith.addf %32, %56 : vector<1x8x8xf32>
    "tpu.trace_start"() <{level = 10 : i32, message = "bqk,bkd->bqd"}> : () -> ()
    %cst_22 = arith.constant dense<0.000000e+00> : vector<1x8x8xf32>
    %58 = tpu.matmul %56, %38, %cst_22 {dimension_numbers = #tpu.dot_dimension_numbers<[2], [1], [1], [2], [0, 0, 0, 1, 1, 2], [0], [0]>} : vector<1x8x8xf32>, vector<1x8x8xf32>, vector<1x8x8xf32> -> vector<1x8x8xf32>
    "tpu.trace_stop"() : () -> ()
    %59 = vector.shape_cast %58 : vector<1x8x8xf32> to vector<8x8xf32>
    %c0_23 = arith.constant 0 : index
    %c8 = arith.constant 8 : index
    %60 = vector.load %arg11[%c0_23, %c8] : memref<8x32xf32, #tpu.memory_space<vmem>>, vector<8x8xf32>
    tpu.vector_store %arg11[%c0_23, %c8], %59 {strides = array<i32>} : memref<8x32xf32, #tpu.memory_space<vmem>>, vector<8x8xf32>,
    %61 = vector.extract_strided_slice %6 {offsets = [0, 0, 16], sizes = [1, 8, 8], strides = [1, 1, 1]} : vector<1x8x96xf32> to vector<1x8x8xf32>
    %62 = vector.extract_strided_slice %6 {offsets = [0, 0, 48], sizes = [1, 8, 8], strides = [1, 1, 1]} : vector<1x8x96xf32> to vector<1x8x8xf32>
    %63 = vector.extract_strided_slice %6 {offsets = [0, 0, 80], sizes = [1, 8, 8], strides = [1, 1, 1]} : vector<1x8x96xf32> to vector<1x8x8xf32>
    "tpu.trace_start"() <{level = 10 : i32, message = "bqd,bkd->bqk"}> : () -> ()
    %cst_24 = arith.constant dense<0.000000e+00> : vector<1x8x8xf32>
    %64 = tpu.matmul %61, %62, %cst_24 {dimension_numbers = #tpu.dot_dimension_numbers<[2], [2], [1], [1], [0, 0, 0, 1, 1, 1], [0], [0]>} : vector<1x8x8xf32>, vector<1x8x8xf32>, vector<1x8x8xf32> -> vector<1x8x8xf32>
    "tpu.trace_stop"() : () -> ()
    %cst_25 = arith.constant 0.353553385 : f32
    %65 = vector.broadcast %cst_25 : f32 to vector<1x8x8xf32>
    %66 = arith.mulf %64, %65 : vector<1x8x8xf32>
    %67 = arith.addf %66, %9 : vector<1x8x8xf32>
    %cst_26 = arith.constant dense<0xFF800000> : vector<1x8xf32>
    %68 = vector.multi_reduction <maximumf>, %67, %cst_26 [2] : vector<1x8x8xf32> to vector<1x8xf32>
    %69 = vector.shape_cast %68 : vector<1x8xf32> to vector<1x8x1xf32>
    %70 = vector.broadcast %69 : vector<1x8x1xf32> to vector<1x8x8xf32>
    %71 = arith.subf %67, %70 : vector<1x8x8xf32>
    %72 = math.exp %71 : vector<1x8x8xf32>
    %cst_27 = arith.constant dense<0.000000e+00> : vector<1x8xf32>
    %73 = vector.multi_reduction <add>, %72, %cst_27 [2] : vector<1x8x8xf32> to vector<1x8xf32>
    %74 = vector.shape_cast %73 : vector<1x8xf32> to vector<1x8x1xf32>
    %75 = tpu.reciprocal %74 {approx = true} : vector<1x8x1xf32> -> vector<1x8x1xf32>
    %76 = arith.mulf %74, %75 : vector<1x8x1xf32>
    %cst_28 = arith.constant 2.000000e+00 : f32
    %77 = vector.broadcast %cst_28 : f32 to vector<1x8x1xf32>
    %78 = arith.subf %77, %76 : vector<1x8x1xf32>
    %79 = arith.mulf %75, %78 : vector<1x8x1xf32>
    %80 = vector.broadcast %79 : vector<1x8x1xf32> to vector<1x8x8xf32>
    %81 = arith.mulf %72, %80 : vector<1x8x8xf32>
    %82 = arith.addf %57, %81 : vector<1x8x8xf32>
    "tpu.trace_start"() <{level = 10 : i32, message = "bqk,bkd->bqd"}> : () -> ()
    %cst_29 = arith.constant dense<0.000000e+00> : vector<1x8x8xf32>
    %83 = tpu.matmul %81, %63, %cst_29 {dimension_numbers = #tpu.dot_dimension_numbers<[2], [1], [1], [2], [0, 0, 0, 1, 1, 2], [0], [0]>} : vector<1x8x8xf32>, vector<1x8x8xf32>, vector<1x8x8xf32> -> vector<1x8x8xf32>
    "tpu.trace_stop"() : () -> ()
    %84 = vector.shape_cast %83 : vector<1x8x8xf32> to vector<8x8xf32>
    %c0_30 = arith.constant 0 : index
    %c16 = arith.constant 16 : index
    %85 = vector.load %arg11[%c0_30, %c16] : memref<8x32xf32, #tpu.memory_space<vmem>>, vector<8x8xf32>
    tpu.vector_store %arg11[%c0_30, %c16], %84 {strides = array<i32>} : memref<8x32xf32, #tpu.memory_space<vmem>>, vector<8x8xf32>,
    %86 = vector.extract_strided_slice %6 {offsets = [0, 0, 24], sizes = [1, 8, 8], strides = [1, 1, 1]} : vector<1x8x96xf32> to vector<1x8x8xf32>
    %87 = vector.extract_strided_slice %6 {offsets = [0, 0, 56], sizes = [1, 8, 8], strides = [1, 1, 1]} : vector<1x8x96xf32> to vector<1x8x8xf32>
    %88 = vector.extract_strided_slice %6 {offsets = [0, 0, 88], sizes = [1, 8, 8], strides = [1, 1, 1]} : vector<1x8x96xf32> to vector<1x8x8xf32>
    "tpu.trace_start"() <{level = 10 : i32, message = "bqd,bkd->bqk"}> : () -> ()
    %cst_31 = arith.constant dense<0.000000e+00> : vector<1x8x8xf32>
    %89 = tpu.matmul %86, %87, %cst_31 {dimension_numbers = #tpu.dot_dimension_numbers<[2], [2], [1], [1], [0, 0, 0, 1, 1, 1], [0], [0]>} : vector<1x8x8xf32>, vector<1x8x8xf32>, vector<1x8x8xf32> -> vector<1x8x8xf32>
    "tpu.trace_stop"() : () -> ()
    %cst_32 = arith.constant 0.353553385 : f32
    %90 = vector.broadcast %cst_32 : f32 to vector<1x8x8xf32>
    %91 = arith.mulf %89, %90 : vector<1x8x8xf32>
    %92 = arith.addf %91, %9 : vector<1x8x8xf32>
    %cst_33 = arith.constant dense<0xFF800000> : vector<1x8xf32>
    %93 = vector.multi_reduction <maximumf>, %92, %cst_33 [2] : vector<1x8x8xf32> to vector<1x8xf32>
    %94 = vector.shape_cast %93 : vector<1x8xf32> to vector<1x8x1xf32>
    %95 = vector.broadcast %94 : vector<1x8x1xf32> to vector<1x8x8xf32>
    %96 = arith.subf %92, %95 : vector<1x8x8xf32>
    %97 = math.exp %96 : vector<1x8x8xf32>
    %cst_34 = arith.constant dense<0.000000e+00> : vector<1x8xf32>
    %98 = vector.multi_reduction <add>, %97, %cst_34 [2] : vector<1x8x8xf32> to vector<1x8xf32>
    %99 = vector.shape_cast %98 : vector<1x8xf32> to vector<1x8x1xf32>
    %100 = tpu.reciprocal %99 {approx = true} : vector<1x8x1xf32> -> vector<1x8x1xf32>
    %101 = arith.mulf %99, %100 : vector<1x8x1xf32>
    %cst_35 = arith.constant 2.000000e+00 : f32
    %102 = vector.broadcast %cst_35 : f32 to vector<1x8x1xf32>
    %103 = arith.subf %102, %101 : vector<1x8x1xf32>
    %104 = arith.mulf %100, %103 : vector<1x8x1xf32>
    %105 = vector.broadcast %104 : vector<1x8x1xf32> to vector<1x8x8xf32>
    %106 = arith.mulf %97, %105 : vector<1x8x8xf32>
    %107 = arith.addf %82, %106 : vector<1x8x8xf32>
    "tpu.trace_start"() <{level = 10 : i32, message = "bqk,bkd->bqd"}> : () -> ()
    %cst_36 = arith.constant dense<0.000000e+00> : vector<1x8x8xf32>
    %108 = tpu.matmul %106, %88, %cst_36 {dimension_numbers = #tpu.dot_dimension_numbers<[2], [1], [1], [2], [0, 0, 0, 1, 1, 2], [0], [0]>} : vector<1x8x8xf32>, vector<1x8x8xf32>, vector<1x8x8xf32> -> vector<1x8x8xf32>
    "tpu.trace_stop"() : () -> ()
    %109 = vector.shape_cast %108 : vector<1x8x8xf32> to vector<8x8xf32>
    %c0_37 = arith.constant 0 : index
    %c24 = arith.constant 24 : index
    %110 = vector.load %arg11[%c0_37, %c24] : memref<8x32xf32, #tpu.memory_space<vmem>>, vector<8x8xf32>
    tpu.vector_store %arg11[%c0_37, %c24], %109 {strides = array<i32>} : memref<8x32xf32, #tpu.memory_space<vmem>>, vector<8x8xf32>,
    %c0_38 = arith.constant 0 : index
    %c0_39 = arith.constant 0 : index
    %111 = vector.load %arg11[%c0_38, %c0_39] : memref<8x32xf32, #tpu.memory_space<vmem>>, vector<8x32xf32>
    %c0_40 = arith.constant 0 : index
    %c0_41 = arith.constant 0 : index
    %112 = vector.load %arg5[%c0_40, %c0_41] : memref<32x32xf32, #tpu.memory_space<vmem>>, vector<32x32xf32>
    %cst_42 = arith.constant dense<0.000000e+00> : vector<8x32xf32>
    %113 = tpu.matmul %111, %112, %cst_42 {dimension_numbers = #tpu.dot_dimension_numbers<[1], [0], [0], [1], [0, 0, 1, 1], [], []>} : vector<8x32xf32>, vector<32x32xf32>, vector<8x32xf32> -> vector<8x32xf32>
    %c0_43 = arith.constant 0 : index
    %c0_44 = arith.constant 0 : index
    %114 = vector.load %arg6[%c0_43, %c0_44] : memref<1x32xf32, #tpu.memory_space<vmem>>, vector<1x32xf32>
    %115 = vector.broadcast %114 : vector<1x32xf32> to vector<8x32xf32>
    %116 = arith.addf %113, %115 : vector<8x32xf32>
    %117 = arith.addf %116, %0 : vector<8x32xf32>
    %cst_45 = arith.constant dense<0.000000e+00> : vector<8xf32>
    %118 = vector.multi_reduction <add>, %117, %cst_45 [1] : vector<8x32xf32> to vector<8xf32>
    %119 = vector.shape_cast %118 : vector<8xf32> to vector<8x1xf32>
    %cst_46 = arith.constant 3.200000e+01 : f32
    %120 = vector.broadcast %cst_46 : f32 to vector<8x1xf32>
    %121 = arith.divf %119, %120 : vector<8x1xf32>
    %122 = vector.broadcast %121 : vector<8x1xf32> to vector<8x32xf32>
    %123 = arith.subf %117, %122 : vector<8x32xf32>
    %124 = arith.mulf %123, %123 : vector<8x32xf32>
    %cst_47 = arith.constant dense<0.000000e+00> : vector<8xf32>
    %125 = vector.multi_reduction <add>, %124, %cst_47 [1] : vector<8x32xf32> to vector<8xf32>
    %126 = vector.shape_cast %125 : vector<8xf32> to vector<8x1xf32>
    %cst_48 = arith.constant 3.200000e+01 : f32
    %127 = vector.broadcast %cst_48 : f32 to vector<8x1xf32>
    %128 = arith.divf %126, %127 : vector<8x1xf32>
    %129 = vector.broadcast %121 : vector<8x1xf32> to vector<8x32xf32>
    %130 = arith.subf %117, %129 : vector<8x32xf32>
    %cst_49 = arith.constant 9.99999974E-6 : f32
    %131 = vector.broadcast %cst_49 : f32 to vector<8x1xf32>
    %132 = arith.addf %128, %131 : vector<8x1xf32>
    %133 = math.rsqrt %132 : vector<8x1xf32>
    %134 = vector.broadcast %133 : vector<8x1xf32> to vector<8x32xf32>
    %135 = arith.mulf %130, %134 : vector<8x32xf32>
    %c0_50 = arith.constant 0 : index
    %c0_51 = arith.constant 0 : index
    %136 = vector.load %arg7[%c0_50, %c0_51] : memref<1x32xf32, #tpu.memory_space<vmem>>, vector<1x32xf32>
    %137 = vector.broadcast %136 : vector<1x32xf32> to vector<8x32xf32>
    %138 = arith.mulf %135, %137 : vector<8x32xf32>
    %c0_52 = arith.constant 0 : index
    %c0_53 = arith.constant 0 : index
    %139 = vector.load %arg8[%c0_52, %c0_53] : memref<1x32xf32, #tpu.memory_space<vmem>>, vector<1x32xf32>
    %140 = vector.broadcast %139 : vector<1x32xf32> to vector<8x32xf32>
    %141 = arith.addf %138, %140 : vector<8x32xf32>
    %c0_54 = arith.constant 0 : index
    %c0_55 = arith.constant 0 : index
    %142 = vector.load %arg9[%c0_54, %c0_55] : memref<8x32xf32, #tpu.memory_space<vmem>>, vector<8x32xf32>
    tpu.vector_store %arg9[%c0_54, %c0_55], %141 {strides = array<i32>} : memref<8x32xf32, #tpu.memory_space<vmem>>, vector<8x32xf32>,
    %cst_56 = arith.constant 2.500000e-01 : f32
    %143 = vector.broadcast %cst_56 : f32 to vector<1x8x8xf32>
    %144 = arith.mulf %107, %143 : vector<1x8x8xf32>
    %145 = vector.shape_cast %144 : vector<1x8x8xf32> to vector<8x8xf32>
    %c0_57 = arith.constant 0 : index
    %c0_58 = arith.constant 0 : index
    %146 = vector.load %arg10[%c0_57, %c0_58] : memref<8x8xf32, #tpu.memory_space<vmem>>, vector<8x8xf32>
    tpu.vector_store %arg10[%c0_57, %c0_58], %145 {strides = array<i32>} : memref<8x8xf32, #tpu.memory_space<vmem>>, vector<8x8xf32>,
    return
  }
  func.func @transform_0(%arg0: i32) -> (i32, i32) {
    %c0_i32 = arith.constant 0 : i32
    %c0_i32_0 = arith.constant 0 : i32
    return %arg0, %c0_i32 : i32, i32
  }
  func.func @transform_1(%arg0: i32) -> (i32, i32, i32) {
    %c0_i32 = arith.constant 0 : i32
    %c0_i32_0 = arith.constant 0 : i32
    %c0_i32_1 = arith.constant 0 : i32
    return %arg0, %c0_i32, %c0_i32_0 : i32, i32, i32
  }
  func.func @transform_2(%arg0: i32) -> (i32, i32) {
    %c0_i32 = arith.constant 0 : i32
    %c0_i32_0 = arith.constant 0 : i32
    %c0_i32_1 = arith.constant 0 : i32
    return %c0_i32, %c0_i32_0 : i32, i32
  }
  func.func @transform_3(%arg0: i32) -> (i32, i32) {
    %c0_i32 = arith.constant 0 : i32
    %c0_i32_0 = arith.constant 0 : i32
    %c0_i32_1 = arith.constant 0 : i32
    return %c0_i32, %c0_i32_0 : i32, i32
  }
  func.func @transform_4(%arg0: i32) -> (i32, i32) {
    %c0_i32 = arith.constant 0 : i32
    %c0_i32_0 = arith.constant 0 : i32
    %c0_i32_1 = arith.constant 0 : i32
    return %c0_i32, %c0_i32_0 : i32, i32
  }
  func.func @transform_5(%arg0: i32) -> (i32, i32) {
    %c0_i32 = arith.constant 0 : i32
    %c0_i32_0 = arith.constant 0 : i32
    %c0_i32_1 = arith.constant 0 : i32
    return %c0_i32, %c0_i32_0 : i32, i32
  }
  func.func @transform_6(%arg0: i32) -> (i32, i32) {
    %c0_i32 = arith.constant 0 : i32
    %c0_i32_0 = arith.constant 0 : i32
    %c0_i32_1 = arith.constant 0 : i32
    return %c0_i32, %c0_i32_0 : i32, i32
  }
  func.func @transform_7(%arg0: i32) -> (i32, i32) {
    %c0_i32 = arith.constant 0 : i32
    %c0_i32_0 = arith.constant 0 : i32
    %c0_i32_1 = arith.constant 0 : i32
    return %c0_i32, %c0_i32_0 : i32, i32
  }
  func.func @transform_8(%arg0: i32) -> (i32, i32) {
    %c0_i32 = arith.constant 0 : i32
    %c0_i32_0 = arith.constant 0 : i32
    return %arg0, %c0_i32 : i32, i32
  }
  func.func @transform_9(%arg0: i32) -> (i32, i32) {
    %c0_i32 = arith.constant 0 : i32
    %c0_i32_0 = arith.constant 0 : i32
    return %arg0, %c0_i32 : i32, i32
  }
}

</mosaic_0001>

<llo_original>
// kernel: tpu_custom_call.1
$region0: #{tpu_custom_call.1}
  #allocation0 [shape = 'u32[]', space=smem, size = 0x4, offset = 0x4, fixed_abs, tag = 'smem constant byte address 0x4 - core index']
  #allocation1 [shape = 'u32[144,128]{1,0:T(1,128)}', space=vmem, size = 0x12000, scoped, tag = 'internal scratch']
  #allocation2 [shape = 'f32[8,32]{1,0:T(8,128)}', space=vmem, size = 0x1000, scoped, tag = 'scratch operand']
  %s0 = inlined_call_operand.hbm [shape: f32[16,32], index: 0, kind: input, shape index: {}]
  %s1 = inlined_call_operand.hbm [shape: f32[2,1,8], index: 1, kind: input, shape index: {}]
  %s2 = inlined_call_operand.hbm [shape: f32[32,96], index: 2, kind: input, shape index: {}]
  %s3 = inlined_call_operand.hbm [shape: f32[1,96], index: 3, kind: input, shape index: {}]
  %s4 = inlined_call_operand.hbm [shape: f32[32,32], index: 4, kind: input, shape index: {}]
  %s5 = inlined_call_operand.hbm [shape: f32[1,32], index: 5, kind: input, shape index: {}]
  %s6 = inlined_call_operand.hbm [shape: f32[1,32], index: 6, kind: input, shape index: {}]
  %s7 = inlined_call_operand.hbm [shape: f32[1,32], index: 7, kind: input, shape index: {}]
  %s8 = inlined_call_operand.hbm [shape: f32[16,32], index: 8, kind: output, shape index: {0}]
  %s9 = inlined_call_operand.hbm [shape: f32[16,8], index: 9, kind: output, shape index: {1}]
  %10 = xla_tuple %s8, %s9
  %s11 = sld [smem:[#allocation0]]
  $region105: #{tpu_custom_call.1} parent=0
    _
  %s13 = ssub.s32 1, %s11
  %s14 = scalar_select 0, %s13, %s11
  $region1: #{tpu_custom_call.1} parent=0
    #allocation3 [shape = 'u8[8192]{0}', space=vmem, size = 0x2000, scoped, tag = 'input window, operand 0']
    #allocation4 [shape = 's32[2]{0}', space=sflag, size = 0x8, scoped, tag = 'scoped memory for tpu_custom_call.1']
    #allocation5 [shape = 's32[2]{0}', space=sflag, size = 0x8, scoped, tag = 'scoped memory for tpu_custom_call.1']
    #allocation6 [shape = 'u8[1024]{0}', space=vmem, size = 0x400, scoped, tag = 'input window, operand 1']
    #allocation7 [shape = 's32[2]{0}', space=sflag, size = 0x8, scoped, tag = 'scoped memory for tpu_custom_call.1']
    #allocation8 [shape = 'u8[16384]{0}', space=vmem, size = 0x4000, scoped, tag = 'input window, operand 2, single buffered']
    #allocation9 [shape = 'u8[512]{0}', space=vmem, size = 0x400, scoped, tag = 'input window, operand 3, single buffered']
    #allocation10 [shape = 's32[1]{0}', space=sflag, size = 0x4, scoped, tag = 'scoped memory for tpu_custom_call.1']
    #allocation11 [shape = 'u8[16384]{0}', space=vmem, size = 0x4000, scoped, tag = 'input window, operand 4, single buffered']
    #allocation12 [shape = 'u8[512]{0}', space=vmem, size = 0x400, scoped, tag = 'input window, operand 5, single buffered']
    #allocation13 [shape = 's32[1]{0}', space=sflag, size = 0x4, scoped, tag = 'scoped memory for tpu_custom_call.1']
    #allocation14 [shape = 'u8[512]{0}', space=vmem, size = 0x400, scoped, tag = 'input window, operand 6, single buffered']
    #allocation15 [shape = 'u8[512]{0}', space=vmem, size = 0x400, scoped, tag = 'input window, operand 7, single buffered']
    #allocation16 [shape = 's32[1]{0}', space=sflag, size = 0x4, scoped, tag = 'scoped memory for tpu_custom_call.1']
    #allocation17 [shape = 'u8[8192]{0}', space=vmem, size = 0x2000, scoped, tag = 'output window, operand 0']
    #allocation18 [shape = 'u8[8192]{0}', space=vmem, size = 0x2000, scoped, tag = 'output window, operand 1']
    #allocation19 [shape = 's32[2]{0}', space=sflag, size = 0x8, scoped, tag = 'scoped memory for tpu_custom_call.1']
    %15 = vsyncpa [#allocation4], 0
    %s16 = scalar_lea.sflag [#allocation4], 1
    %17 = vsyncpa %s16, 0
    %18 = vsyncpa [#allocation7], 0
    %s19 = scalar_lea.sflag [#allocation7], 1
    %20 = vsyncpa %s19, 0
    %21 = vsyncpa [#allocation10], 0
    %22 = vsyncpa [#allocation13], 0
    %23 = vsyncpa [#allocation16], 0
    %24 = vsyncpa [#allocation5], 0
    %s25 = scalar_lea.sflag [#allocation5], 1
    %26 = vsyncpa %s25, 0
    %27 = vsyncpa [#allocation19], 0
    %s28 = scalar_lea.sflag [#allocation19], 1
    %29 = vsyncpa %s28, 0
    loop: start=0, step=1, limit=4
    $region2: #{tpu_custom_call.1} parent=1 // loop_pre_header
      _
    $region3: #{tpu_custom_call.1} parent=1 // loop_header
      %s31 = sphi 0, %s35
      %p32 = scmp.ge.s32.totalorder %s31, 4
      %s41 = sphi 0, %s43
      %s44 = sphi 0, %s41
      %s45 = sphi 0, %s44
      %s61 = sphi 0, %s45
      %s67 = sphi 0, %s69
      %s70 = sphi 0, %s67
      %s71 = sphi 0, %s70
      %s87 = sphi 0, %s71
      %s91 = sphi 0, %s91
      %s93 = sphi 0, %s91
      %s94 = sphi 0, %s93
      %s108 = sphi 0, %s94
      %s112 = sphi 0, %s112
      %s114 = sphi 0, %s112
      %s115 = sphi 0, %s114
      %s129 = sphi 0, %s115
      %s133 = sphi 0, %s133
      %s135 = sphi 0, %s133
      %s136 = sphi 0, %s135
      %s150 = sphi 0, %s136
      %s154 = sphi 0, %s154
      %s156 = sphi 0, %s154
      %s157 = sphi 0, %s156
      %s171 = sphi 0, %s157
      %s175 = sphi 0, %s175
      %s177 = sphi 0, %s175
      %s178 = sphi 0, %s177
      %s192 = sphi 0, %s178
      %s196 = sphi 0, %s196
      %s198 = sphi 0, %s196
      %s199 = sphi 0, %s198
      %s213 = sphi 0, %s199
      %s219 = sphi 0, %s221
      %s222 = sphi 0, %s219
      %s223 = sphi 0, %s222
      %s239 = sphi 0, %s223
      %s245 = sphi 0, %s247
      %s248 = sphi 0, %s245
      %s249 = sphi 0, %s248
      %s265 = sphi 0, %s249
    $region4: #{tpu_custom_call.1} parent=1 // loop_header_branch
      %34 = sbr.rel (%p32) target = $region8
    $region5: #{tpu_custom_call.1} parent=1 // loop_body
      %s36 = ssub.s32 %s31, 1
      %s37 = ssub.s32 %s31, 2
      %s38 = sadd.s32 %s31, 1
      %s39 = ssub.s32 %s31, %s38
      %p40 = scmp.eq.s32.totalorder %s39, 0
      %s42 = sadd.s32 %s41, 1
      %s43 = scalar_select %p40, %s41, %s42
      %p46 = pneg %p40
      %p47 = scmp.eq.s32.totalorder %s31, 1
      %p48 = por %p46, %p47
      %p49 = scmp.ne.s32.totalorder %s41, %s44
      %p50 = scmp.eq.s32.totalorder %s31, 0
      %p51 = por %p49, %p50
      %p52 = scmp.ne.s32.totalorder %s41, %s44
      %p53 = scmp.eq.s32.totalorder %s36, 1
      %p54 = por %p52, %p53
      %p55 = scmp.ne.s32.totalorder %s44, %s45
      %p56 = scmp.eq.s32.totalorder %s36, 0
      %p57 = por %p55, %p56
      %p58 = scmp.ne.s32.totalorder %s44, %s45
      %p59 = scmp.eq.s32.totalorder %s37, 1
      %p60 = por %p58, %p59
      %p62 = scmp.ne.s32.totalorder %s45, %s61
      %p63 = scmp.eq.s32.totalorder %s37, 0
      %p64 = por %p62, %p63
      %s65 = ssub.s32 %s31, %s38
      %p66 = scmp.eq.s32.totalorder %s65, 0
      %s68 = sadd.s32 %s67, 1
      %s69 = scalar_select %p66, %s67, %s68
      %p72 = pneg %p66
      %p73 = scmp.eq.s32.totalorder %s31, 1
      %p74 = por %p72, %p73
      %p75 = scmp.ne.s32.totalorder %s67, %s70
      %p76 = scmp.eq.s32.totalorder %s31, 0
      %p77 = por %p75, %p76
      %p78 = scmp.ne.s32.totalorder %s67, %s70
      %p79 = scmp.eq.s32.totalorder %s36, 1
      %p80 = por %p78, %p79
      %p81 = scmp.ne.s32.totalorder %s70, %s71
      %p82 = scmp.eq.s32.totalorder %s36, 0
      %p83 = por %p81, %p82
      %p84 = scmp.ne.s32.totalorder %s70, %s71
      %p85 = scmp.eq.s32.totalorder %s37, 1
      %p86 = por %p84, %p85
      %p88 = scmp.ne.s32.totalorder %s71, %s87
      %p89 = scmp.eq.s32.totalorder %s37, 0
      %p90 = por %p88, %p89
      %s92 = sadd.s32 %s91, 1
      %p95 = scmp.eq.s32.totalorder %s31, 1
      %p96 = scmp.ne.s32.totalorder %s91, %s93
      %p97 = scmp.eq.s32.totalorder %s31, 0
      %p98 = por %p96, %p97
      %p99 = scmp.ne.s32.totalorder %s91, %s93
      %p100 = scmp.eq.s32.totalorder %s36, 1
      %p101 = por %p99, %p100
      %p102 = scmp.ne.s32.totalorder %s93, %s94
      %p103 = scmp.eq.s32.totalorder %s36, 0
      %p104 = por %p102, %p103
      %p105 = scmp.ne.s32.totalorder %s93, %s94
      %p106 = scmp.eq.s32.totalorder %s37, 1
      %p107 = por %p105, %p106
      %p109 = scmp.ne.s32.totalorder %s94, %s108
      %p110 = scmp.eq.s32.totalorder %s37, 0
      %p111 = por %p109, %p110
      %s113 = sadd.s32 %s112, 1
      %p116 = scmp.eq.s32.totalorder %s31, 1
      %p117 = scmp.ne.s32.totalorder %s112, %s114
      %p118 = scmp.eq.s32.totalorder %s31, 0
      %p119 = por %p117, %p118
      %p120 = scmp.ne.s32.totalorder %s112, %s114
      %p121 = scmp.eq.s32.totalorder %s36, 1
      %p122 = por %p120, %p121
      %p123 = scmp.ne.s32.totalorder %s114, %s115
      %p124 = scmp.eq.s32.totalorder %s36, 0
      %p125 = por %p123, %p124
      %p126 = scmp.ne.s32.totalorder %s114, %s115
      %p127 = scmp.eq.s32.totalorder %s37, 1
      %p128 = por %p126, %p127
      %p130 = scmp.ne.s32.totalorder %s115, %s129
      %p131 = scmp.eq.s32.totalorder %s37, 0
      %p132 = por %p130, %p131
      %s134 = sadd.s32 %s133, 1
      %p137 = scmp.eq.s32.totalorder %s31, 1
      %p138 = scmp.ne.s32.totalorder %s133, %s135
      %p139 = scmp.eq.s32.totalorder %s31, 0
      %p140 = por %p138, %p139
      %p141 = scmp.ne.s32.totalorder %s133, %s135
      %p142 = scmp.eq.s32.totalorder %s36, 1
      %p143 = por %p141, %p142
      %p144 = scmp.ne.s32.totalorder %s135, %s136
      %p145 = scmp.eq.s32.totalorder %s36, 0
      %p146 = por %p144, %p145
      %p147 = scmp.ne.s32.totalorder %s135, %s136
      %p148 = scmp.eq.s32.totalorder %s37, 1
      %p149 = por %p147, %p148
      %p151 = scmp.ne.s32.totalorder %s136, %s150
      %p152 = scmp.eq.s32.totalorder %s37, 0
      %p153 = por %p151, %p152
      %s155 = sadd.s32 %s154, 1
      %p158 = scmp.eq.s32.totalorder %s31, 1
      %p159 = scmp.ne.s32.totalorder %s154, %s156
      %p160 = scmp.eq.s32.totalorder %s31, 0
      %p161 = por %p159, %p160
      %p162 = scmp.ne.s32.totalorder %s154, %s156
      %p163 = scmp.eq.s32.totalorder %s36, 1
      %p164 = por %p162, %p163
      %p165 = scmp.ne.s32.totalorder %s156, %s157
      %p166 = scmp.eq.s32.totalorder %s36, 0
      %p167 = por %p165, %p166
      %p168 = scmp.ne.s32.totalorder %s156, %s157
      %p169 = scmp.eq.s32.totalorder %s37, 1
      %p170 = por %p168, %p169
      %p172 = scmp.ne.s32.totalorder %s157, %s171
      %p173 = scmp.eq.s32.totalorder %s37, 0
      %p174 = por %p172, %p173
      %s176 = sadd.s32 %s175, 1
      %p179 = scmp.eq.s32.totalorder %s31, 1
      %p180 = scmp.ne.s32.totalorder %s175, %s177
      %p181 = scmp.eq.s32.totalorder %s31, 0
      %p182 = por %p180, %p181
      %p183 = scmp.ne.s32.totalorder %s175, %s177
      %p184 = scmp.eq.s32.totalorder %s36, 1
      %p185 = por %p183, %p184
      %p186 = scmp.ne.s32.totalorder %s177, %s178
      %p187 = scmp.eq.s32.totalorder %s36, 0
      %p188 = por %p186, %p187
      %p189 = scmp.ne.s32.totalorder %s177, %s178
      %p190 = scmp.eq.s32.totalorder %s37, 1
      %p191 = por %p189, %p190
      %p193 = scmp.ne.s32.totalorder %s178, %s192
      %p194 = scmp.eq.s32.totalorder %s37, 0
      %p195 = por %p193, %p194
      %s197 = sadd.s32 %s196, 1
      %p200 = scmp.eq.s32.totalorder %s31, 1
      %p201 = scmp.ne.s32.totalorder %s196, %s198
      %p202 = scmp.eq.s32.totalorder %s31, 0
      %p203 = por %p201, %p202
      %p204 = scmp.ne.s32.totalorder %s196, %s198
      %p205 = scmp.eq.s32.totalorder %s36, 1
      %p206 = por %p204, %p205
      %p207 = scmp.ne.s32.totalorder %s198, %s199
      %p208 = scmp.eq.s32.totalorder %s36, 0
      %p209 = por %p207, %p208
      %p210 = scmp.ne.s32.totalorder %s198, %s199
      %p211 = scmp.eq.s32.totalorder %s37, 1
      %p212 = por %p210, %p211
      %p214 = scmp.ne.s32.totalorder %s199, %s213
      %p215 = scmp.eq.s32.totalorder %s37, 0
      %p216 = por %p214, %p215
      %s217 = ssub.s32 %s31, %s38
      %p218 = scmp.eq.s32.totalorder %s217, 0
      %s220 = sadd.s32 %s219, 1
      %s221 = scalar_select %p218, %s219, %s220
      %p224 = pneg %p218
      %p225 = scmp.eq.s32.totalorder %s31, 1
      %p226 = por %p224, %p225
      %p227 = scmp.ne.s32.totalorder %s219, %s222
      %p228 = scmp.eq.s32.totalorder %s31, 0
      %p229 = por %p227, %p228
      %p230 = scmp.ne.s32.totalorder %s219, %s222
      %p231 = scmp.eq.s32.totalorder %s36, 1
      %p232 = por %p230, %p231
      %p233 = scmp.ne.s32.totalorder %s222, %s223
      %p234 = scmp.eq.s32.totalorder %s36, 0
      %p235 = por %p233, %p234
      %p236 = scmp.ne.s32.totalorder %s222, %s223
      %p237 = scmp.eq.s32.totalorder %s37, 1
      %p238 = por %p236, %p237
      %p240 = scmp.ne.s32.totalorder %s223, %s239
      %p241 = scmp.eq.s32.totalorder %s37, 0
      %p242 = por %p240, %p241
      %s243 = ssub.s32 %s31, %s38
      %p244 = scmp.eq.s32.totalorder %s243, 0
      %s246 = sadd.s32 %s245, 1
      %s247 = scalar_select %p244, %s245, %s246
      %p250 = pneg %p244
      %p251 = scmp.eq.s32.totalorder %s31, 1
      %p252 = por %p250, %p251
      %p253 = scmp.ne.s32.totalorder %s245, %s248
      %p254 = scmp.eq.s32.totalorder %s31, 0
      %p255 = por %p253, %p254
      %p256 = scmp.ne.s32.totalorder %s245, %s248
      %p257 = scmp.eq.s32.totalorder %s36, 1
      %p258 = por %p256, %p257
      %p259 = scmp.ne.s32.totalorder %s248, %s249
      %p260 = scmp.eq.s32.totalorder %s36, 0
      %p261 = por %p259, %p260
      %p262 = scmp.ne.s32.totalorder %s248, %s249
      %p263 = scmp.eq.s32.totalorder %s37, 1
      %p264 = por %p262, %p263
      %p266 = scmp.ne.s32.totalorder %s249, %s265
      %p267 = scmp.eq.s32.totalorder %s37, 0
      %p268 = por %p266, %p267
      %p269 = scmp.le.s32.totalorder 1, %s31
      %p270 = scmp.lt.s32.totalorder %s31, 3
      %p271 = pnand %p269, %p270
      %p272 = pneg %p271
      // Predicated region
      $region9: #{tpu_custom_call.1} parent=5 // pred_check
        _
      $region10: #{tpu_custom_call.1} parent=5 // pred_check_branch
        %274 = sbr.rel (%p271) target = $region12
      $region11: #{tpu_custom_call.1} parent=5 // pred_region
        %s275 = ssub.s32 %s31, 1
        // Predicated region
        $region13: #{tpu_custom_call.1} parent=11 // pred_check
          %p276 = pneg %p104
        $region14: #{tpu_custom_call.1} parent=11 // pred_check_branch
          %278 = sbr.rel (%p276) target = $region16
        $region15: #{tpu_custom_call.1} parent=11 // pred_region
          %s280 = ssub.s32 512, 512
          %281 = vsyncadd [#allocation7], %s280
          %s282 = sshll.u32 [#allocation8], 4
          %s283 = int_to_ptr.vmem [resolvable:$true] %s282
          %288 = dma.hbm_to_vmem [thread:$0]  %s2, 512, %s283, [#allocation7], 128, 128, 8
        $region16: #{tpu_custom_call.1} parent=11 // pred_fallthru
          _
        // Predicated region
        $region17: #{tpu_custom_call.1} parent=11 // pred_check
          %p289 = pneg %p125
        $region18: #{tpu_custom_call.1} parent=11 // pred_check_branch
          %291 = sbr.rel (%p289) target = $region20
        $region19: #{tpu_custom_call.1} parent=11 // pred_region
          %s293 = ssub.s32 16, 16
          %294 = vsyncadd [#allocation10], %s293
          %s296 = sshll.u32 [#allocation9], 4
          %s297 = int_to_ptr.vmem [resolvable:$true] %s296
          %299 = dma.hbm_to_vmem [thread:$0]  %s3, 16, %s297, [#allocation10]
        $region20: #{tpu_custom_call.1} parent=11 // pred_fallthru
          _
        // Predicated region
        $region21: #{tpu_custom_call.1} parent=11 // pred_check
          %p300 = pneg %p146
        $region22: #{tpu_custom_call.1} parent=11 // pred_check_branch
          %302 = sbr.rel (%p300) target = $region24
        $region23: #{tpu_custom_call.1} parent=11 // pred_region
          %s304 = ssub.s32 512, 512
          %305 = vsyncadd [#allocation10], %s304
          %s306 = sshll.u32 [#allocation11], 4
          %s307 = int_to_ptr.vmem [resolvable:$true] %s306
          %312 = dma.hbm_to_vmem [thread:$0]  %s4, 512, %s307, [#allocation10], 128, 128, 8
        $region24: #{tpu_custom_call.1} parent=11 // pred_fallthru
          _
        // Predicated region
        $region25: #{tpu_custom_call.1} parent=11 // pred_check
          %p313 = pneg %p167
        $region26: #{tpu_custom_call.1} parent=11 // pred_check_branch
          %315 = sbr.rel (%p313) target = $region28
        $region27: #{tpu_custom_call.1} parent=11 // pred_region
          %s317 = ssub.s32 16, 16
          %318 = vsyncadd [#allocation13], %s317
          %s320 = sshll.u32 [#allocation12], 4
          %s321 = int_to_ptr.vmem [resolvable:$true] %s320
          %323 = dma.hbm_to_vmem [thread:$0]  %s5, 16, %s321, [#allocation13]
        $region28: #{tpu_custom_call.1} parent=11 // pred_fallthru
          _
        // Predicated region
        $region29: #{tpu_custom_call.1} parent=11 // pred_check
          %p324 = pneg %p188
        $region30: #{tpu_custom_call.1} parent=11 // pred_check_branch
          %326 = sbr.rel (%p324) target = $region32
        $region31: #{tpu_custom_call.1} parent=11 // pred_region
          %s328 = ssub.s32 16, 16
          %329 = vsyncadd [#allocation13], %s328
          %s331 = sshll.u32 [#allocation14], 4
          %s332 = int_to_ptr.vmem [resolvable:$true] %s331
          %334 = dma.hbm_to_vmem [thread:$0]  %s6, 16, %s332, [#allocation13]
        $region32: #{tpu_custom_call.1} parent=11 // pred_fallthru
          _
        // Predicated region
        $region33: #{tpu_custom_call.1} parent=11 // pred_check
          %p335 = pneg %p209
        $region34: #{tpu_custom_call.1} parent=11 // pred_check_branch
          %337 = sbr.rel (%p335) target = $region36
        $region35: #{tpu_custom_call.1} parent=11 // pred_region
          %s339 = ssub.s32 16, 16
          %340 = vsyncadd [#allocation16], %s339
          %s342 = sshll.u32 [#allocation15], 4
          %s343 = int_to_ptr.vmem [resolvable:$true] %s342
          %345 = dma.hbm_to_vmem [thread:$0]  %s7, 16, %s343, [#allocation16]
        $region36: #{tpu_custom_call.1} parent=11 // pred_fallthru
          _
      $region12: #{tpu_custom_call.1} parent=5 // pred_fallthru
        _
      %p346 = scmp.lt.s32.totalorder %s31, 2
      // Predicated region
      $region37: #{tpu_custom_call.1} parent=5 // pred_check
        %p347 = pneg %p346
      $region38: #{tpu_custom_call.1} parent=5 // pred_check_branch
        %349 = sbr.rel (%p347) target = $region40
      $region39: #{tpu_custom_call.1} parent=5 // pred_region
        // Predicated region
        $region41: #{tpu_custom_call.1} parent=39 // pred_check
          %p350 = pneg %p51
        $region42: #{tpu_custom_call.1} parent=39 // pred_check_branch
          %352 = sbr.rel (%p350) target = $region44
        $region43: #{tpu_custom_call.1} parent=39 // pred_region
          %s353 = sand.u32 %s41, 1
          %s354 = scalar_lea.sflag [#allocation4], %s353
          %s355 = sand.u32 %s41, 1
          %s356 = smul.addr %s355, 8
          %s357 = scalar_lea.vmem [#allocation3], %s356
          %s359 = ssub.s32 128, 128
          %360 = vsyncadd %s354, %s359
          %s361 = smul.addr %s31, 128
          %s362 = scalar_lea.hbm %s0, %s361
          %s364 = sshll.u32 %s357, 4
          %s365 = int_to_ptr.vmem [resolvable:$true] %s364
          %367 = dma.hbm_to_vmem [thread:$0]  %s362, 128, %s365, %s354
        $region44: #{tpu_custom_call.1} parent=39 // pred_fallthru
          _
        // Predicated region
        $region45: #{tpu_custom_call.1} parent=39 // pred_check
          %p368 = pneg %p77
        $region46: #{tpu_custom_call.1} parent=39 // pred_check_branch
          %370 = sbr.rel (%p368) target = $region48
        $region47: #{tpu_custom_call.1} parent=39 // pred_region
          %s371 = sand.u32 %s31, 1
          %s372 = scalar_lea.sflag [#allocation7], %s371
          %s373 = sand.u32 %s67, 1
          %s374 = scalar_lea.vmem [#allocation6], %s373
          %s376 = ssub.s32 16, 16
          %377 = vsyncadd %s372, %s376
          %s378 = smul.addr %s31, 16
          %s379 = scalar_lea.hbm %s1, %s378
          %s381 = sshll.u32 %s374, 4
          %s382 = int_to_ptr.vmem [resolvable:$true] %s381
          %384 = dma.hbm_to_vmem [thread:$0]  %s379, 16, %s382, %s372
        $region48: #{tpu_custom_call.1} parent=39 // pred_fallthru
          _
      $region40: #{tpu_custom_call.1} parent=5 // pred_fallthru
        _
      %p385 = scmp.le.s32.totalorder 1, %s31
      %p386 = scmp.lt.s32.totalorder %s31, 3
      %p387 = pnand %p385, %p386
      %p388 = pneg %p387
      // Predicated region
      $region49: #{tpu_custom_call.1} parent=5 // pred_check
        _
      $region50: #{tpu_custom_call.1} parent=5 // pred_check_branch
        %390 = sbr.rel (%p387) target = $region52
      $region51: #{tpu_custom_call.1} parent=5 // pred_region
        %s391 = ssub.s32 %s31, 1
        %s392 = sand.u32 %s44, 1
        %s393 = scalar_lea.sflag [#allocation4], %s392
        %s394 = sand.u32 %s44, 1
        %s395 = smul.addr %s394, 8
        %s396 = scalar_lea.vmem [#allocation3], %s395
        // Predicated region
        $region53: #{tpu_custom_call.1} parent=51 // pred_check
          %p397 = pneg %p57
        $region54: #{tpu_custom_call.1} parent=51 // pred_check_branch
          %399 = sbr.rel (%p397) target = $region56
        $region55: #{tpu_custom_call.1} parent=51 // pred_region
          %400 = dma.done %s393, 128
        $region56: #{tpu_custom_call.1} parent=51 // pred_fallthru
          _
        %s401 = sand.u32 %s36, 1
        %s402 = scalar_lea.sflag [#allocation7], %s401
        %s403 = sand.u32 %s70, 1
        %s404 = scalar_lea.vmem [#allocation6], %s403
        // Predicated region
        $region57: #{tpu_custom_call.1} parent=51 // pred_check
          %p405 = pneg %p83
        $region58: #{tpu_custom_call.1} parent=51 // pred_check_branch
          %407 = sbr.rel (%p405) target = $region60
        $region59: #{tpu_custom_call.1} parent=51 // pred_region
          %408 = dma.done %s402, 16
        $region60: #{tpu_custom_call.1} parent=51 // pred_fallthru
          _
        // Predicated region
        $region61: #{tpu_custom_call.1} parent=51 // pred_check
          %p409 = pneg %p104
        $region62: #{tpu_custom_call.1} parent=51 // pred_check_branch
          %411 = sbr.rel (%p409) target = $region64
        $region63: #{tpu_custom_call.1} parent=51 // pred_region
          %412 = dma.done [#allocation7], 512
        $region64: #{tpu_custom_call.1} parent=51 // pred_fallthru
          _
        // Predicated region
        $region65: #{tpu_custom_call.1} parent=51 // pred_check
          %p413 = pneg %p125
        $region66: #{tpu_custom_call.1} parent=51 // pred_check_branch
          %415 = sbr.rel (%p413) target = $region68
        $region67: #{tpu_custom_call.1} parent=51 // pred_region
          %416 = dma.done [#allocation10], 16
        $region68: #{tpu_custom_call.1} parent=51 // pred_fallthru
          _
        // Predicated region
        $region69: #{tpu_custom_call.1} parent=51 // pred_check
          %p417 = pneg %p146
        $region70: #{tpu_custom_call.1} parent=51 // pred_check_branch
          %419 = sbr.rel (%p417) target = $region72
        $region71: #{tpu_custom_call.1} parent=51 // pred_region
          %420 = dma.done [#allocation10], 512
        $region72: #{tpu_custom_call.1} parent=51 // pred_fallthru
          _
        // Predicated region
        $region73: #{tpu_custom_call.1} parent=51 // pred_check
          %p421 = pneg %p167
        $region74: #{tpu_custom_call.1} parent=51 // pred_check_branch
          %423 = sbr.rel (%p421) target = $region76
        $region75: #{tpu_custom_call.1} parent=51 // pred_region
          %424 = dma.done [#allocation13], 16
        $region76: #{tpu_custom_call.1} parent=51 // pred_fallthru
          _
        // Predicated region
        $region77: #{tpu_custom_call.1} parent=51 // pred_check
          %p425 = pneg %p188
        $region78: #{tpu_custom_call.1} parent=51 // pred_check_branch
          %427 = sbr.rel (%p425) target = $region80
        $region79: #{tpu_custom_call.1} parent=51 // pred_region
          %428 = dma.done [#allocation13], 16
        $region80: #{tpu_custom_call.1} parent=51 // pred_fallthru
          _
        // Predicated region
        $region81: #{tpu_custom_call.1} parent=51 // pred_check
          %p429 = pneg %p209
        $region82: #{tpu_custom_call.1} parent=51 // pred_check_branch
          %431 = sbr.rel (%p429) target = $region84
        $region83: #{tpu_custom_call.1} parent=51 // pred_region
          %432 = dma.done [#allocation16], 16
        $region84: #{tpu_custom_call.1} parent=51 // pred_fallthru
          _
        %s433 = sand.u32 %s44, 1
        %s434 = scalar_lea.sflag [#allocation4], %s433
        %s435 = sand.u32 %s44, 1
        %s436 = smul.addr %s435, 8
        %s437 = scalar_lea.vmem [#allocation3], %s436
        %p438 = pneg %p57
        %p439 = pneg %p54
        %s440 = sand.u32 %s36, 1
        %s441 = scalar_lea.sflag [#allocation7], %s440
        %s442 = sand.u32 %s70, 1
        %s443 = scalar_lea.vmem [#allocation6], %s442
        %p444 = pneg %p83
        %p445 = pneg %p80
        %p446 = pneg %p104
        %p447 = pneg %p101
        %p448 = pneg %p125
        %p449 = pneg %p122
        %p450 = pneg %p146
        %p451 = pneg %p143
        %p452 = pneg %p167
        %p453 = pneg %p164
        %p454 = pneg %p188
        %p455 = pneg %p185
        %p456 = pneg %p209
        %p457 = pneg %p206
        %p458 = pneg %p235
        %p459 = pneg %p232
        %s460 = sand.u32 %s222, 1
        %s461 = scalar_lea.sflag [#allocation5], %s460
        %s462 = sand.u32 %s222, 1
        %s463 = smul.addr %s462, 8
        %s464 = scalar_lea.vmem [#allocation17], %s463
        %p465 = pneg %p261
        %p466 = pneg %p258
        %s467 = sand.u32 %s248, 1
        %s468 = scalar_lea.sflag [#allocation19], %s467
        %s469 = sand.u32 %s248, 1
        %s470 = smul.addr %s469, 8
        %s471 = scalar_lea.vmem [#allocation18], %s470
        %v472 = vld [vmem:[%s396] sm:$0xff]
        %v473 = vld [vmem:[#allocation8] sm:$0xff]
        %v474 = vld [vmem:[#allocation8 + $0x8] sm:$0xff]
        %v475 = vld [vmem:[#allocation8 + $0x10] sm:$0xff]
        %v476 = vld [vmem:[#allocation8 + $0x18] sm:$0xff]
        %v477 = vld [vmem:[#allocation9] sm:$0x1]
        %v479 = vlaneseq
        %v480 = vshrl.u32 %v479, 7
        %v481 = vsub.s32 0, %v480
        %v482 = vrot.slane %v477, %v481
        %vm484 = vcmask 261120
        %v486 = vsel %vm484, %v472, 0
        %488 = vmatprep.subr.mxu0 0.0
        %489 = vmatpush1.msra.mxu0 %v473
        %490 = vmatprep.subr.mxu0 0.0
        %491 = vmatpush1.msra.mxu0 %v474
        %492 = vmatprep.subr.mxu0 0.0
        %493 = vmatpush1.msra.mxu0 %v475
        %494 = vmatprep.subr.mxu0 0.0
        %495 = vmatpush1.msra.mxu0 %v476
        %496 = vmatprep.subr.mxu0 0.0
        %497 = vmatpush1.msra.mxu0 0.0
        %498 = vmatprep.subr.mxu0 0.0
        %499 = vmatpush1.msra.mxu0 0.0
        %500 = vmatprep.subr.mxu0 0.0
        %501 = vmatpush1.msra.mxu0 0.0
        %502 = vmatprep.subr.mxu0 0.0
        %503 = vmatpush1.msra.mxu0 0.0
        %504 = vmatprep.subr.mxu0 0.0
        %505 = vmatpush1.msra.mxu0 0.0
        %506 = vmatprep.subr.mxu0 0.0
        %507 = vmatpush1.msra.mxu0 0.0
        %508 = vmatprep.subr.mxu0 0.0
        %509 = vmatpush1.msra.mxu0 0.0
        %510 = vmatprep.subr.mxu0 0.0
        %511 = vmatpush1.msra.mxu0 0.0
        %512 = vmatprep.subr.mxu0 0.0
        %513 = vmatpush1.msra.mxu0 0.0
        %514 = vmatprep.subr.mxu0 0.0
        %515 = vmatpush1.msra.mxu0 0.0
        %516 = vmatprep.subr.mxu0 0.0
        %517 = vmatpush1.msra.mxu0 0.0
        %518 = vmatprep.subr.mxu0 0.0
        %519 = vmatpush1.msra.mxu0 0.0
        %520 = vmatprep.subr.mxu0 0.0
        %521 = vmatpush1.msra.mxu0 0.0
        %522 = vmatprep.subr.mxu0 0.0
        %523 = vmatpush1.msra.mxu0 0.0
        %524 = vmatprep.subr.mxu0 0.0
        %525 = vmatpush1.msra.mxu0 0.0
        %526 = vmatprep.subr.mxu0 0.0
        %527 = vmatpush1.msra.mxu0 0.0
        %528 = vmatprep.subr.mxu0 0.0
        %529 = vmatpush1.msra.mxu0 0.0
        %530 = vmatprep.subr.mxu0 0.0
        %531 = vmatpush1.msra.mxu0 0.0
        %532 = vmatprep.subr.mxu0 0.0
        %533 = vmatpush1.msra.mxu0 0.0
        %534 = vmatprep.subr.mxu0 0.0
        %535 = vmatpush1.msra.mxu0 0.0
        %536 = vmatprep.subr.mxu0 0.0
        %537 = vmatpush1.msra.mxu0 0.0
        %538 = vmatprep.subr.mxu0 0.0
        %539 = vmatpush1.msra.mxu0 0.0
        %540 = vmatprep.subr.mxu0 0.0
        %541 = vmatpush1.msra.mxu0 0.0
        %542 = vmatprep.subr.mxu0 0.0
        %543 = vmatpush1.msra.mxu0 0.0
        %544 = vmatprep.subr.mxu0 0.0
        %545 = vmatpush1.msra.mxu0 0.0
        %546 = vmatprep.subr.mxu0 0.0
        %547 = vmatpush1.msra.mxu0 0.0
        %548 = vmatprep.subr.mxu0 0.0
        %549 = vmatpush1.msra.mxu0 0.0
        %550 = vmatprep.subr.mxu0 0.0
        %551 = vmatpush1.msra.mxu0 0.0
        %552 = vmatprep.mubr.f32.mxu0 0.0
        %553 = vmatmul.mubr.f32.gmra.mrb[0].mxu0 %v486
        %v554 = vpop.f32.mrb[0].mxu0
        %v555 = vadd.f32 %v482, %v554
        %v556 = vpop.f32.mrb[0].mxu0
        %557 = vdwg.mxu0
        %v558 = vld [vmem:[%s404] sm:$0x1]
        %v560 = vlaneseq
        %v561 = vshrl.u32 %v560, 7
        %v562 = vsub.s32 0, %v561
        %v563 = vrot.slane %v558, %v562
        %566 = vrot.lane.b32.xlu0 %v555, 96
        %v567 = vpop.permute.xlu0 %566
        %vm568 = vcmask 64512
        %v569 = vsel %vm568, %v555, 0
        %v571 = vsel %vm568, %v567, 0
        %573 = vmatprep.subr.mxu0 0.0
        %574 = vmatpush1.xpose.msra.mxu0 %v571
        %575 = vmatprep.subr.mxu0 0.0
        %576 = vmatpush1.xpose.msra.mxu0 0.0
        %577 = vmatprep.subr.mxu0 0.0
        %578 = vmatpush1.xpose.msra.mxu0 0.0
        %579 = vmatprep.subr.mxu0 0.0
        %580 = vmatpush1.xpose.msra.mxu0 0.0
        %581 = vmatprep.subr.mxu0 0.0
        %582 = vmatpush1.xpose.msra.mxu0 0.0
        %583 = vmatprep.subr.mxu0 0.0
        %584 = vmatpush1.xpose.msra.mxu0 0.0
        %585 = vmatprep.subr.mxu0 0.0
        %586 = vmatpush1.xpose.msra.mxu0 0.0
        %587 = vmatprep.subr.mxu0 0.0
        %588 = vmatpush1.xpose.msra.mxu0 0.0
        %589 = vmatprep.subr.mxu0 0.0
        %590 = vmatpush1.xpose.msra.mxu0 0.0
        %591 = vmatprep.subr.mxu0 0.0
        %592 = vmatpush1.xpose.msra.mxu0 0.0
        %593 = vmatprep.subr.mxu0 0.0
        %594 = vmatpush1.xpose.msra.mxu0 0.0
        %595 = vmatprep.subr.mxu0 0.0
        %596 = vmatpush1.xpose.msra.mxu0 0.0
        %597 = vmatprep.subr.mxu0 0.0
        %598 = vmatpush1.xpose.msra.mxu0 0.0
        %599 = vmatprep.subr.mxu0 0.0
        %600 = vmatpush1.xpose.msra.mxu0 0.0
        %601 = vmatprep.subr.mxu0 0.0
        %602 = vmatpush1.xpose.msra.mxu0 0.0
        %603 = vmatprep.subr.mxu0 0.0
        %604 = vmatpush1.xpose.msra.mxu0 0.0
        %605 = vmatprep.subr.mxu0 0.0
        %606 = vmatpush1.xpose.msra.mxu0 0.0
        %607 = vmatprep.subr.mxu0 0.0
        %608 = vmatpush1.xpose.msra.mxu0 0.0
        %609 = vmatprep.subr.mxu0 0.0
        %610 = vmatpush1.xpose.msra.mxu0 0.0
        %611 = vmatprep.subr.mxu0 0.0
        %612 = vmatpush1.xpose.msra.mxu0 0.0
        %613 = vmatprep.subr.mxu0 0.0
        %614 = vmatpush1.xpose.msra.mxu0 0.0
        %615 = vmatprep.subr.mxu0 0.0
        %616 = vmatpush1.xpose.msra.mxu0 0.0
        %617 = vmatprep.subr.mxu0 0.0
        %618 = vmatpush1.xpose.msra.mxu0 0.0
        %619 = vmatprep.subr.mxu0 0.0
        %620 = vmatpush1.xpose.msra.mxu0 0.0
        %621 = vmatprep.subr.mxu0 0.0
        %622 = vmatpush1.xpose.msra.mxu0 0.0
        %623 = vmatprep.subr.mxu0 0.0
        %624 = vmatpush1.xpose.msra.mxu0 0.0
        %625 = vmatprep.subr.mxu0 0.0
        %626 = vmatpush1.xpose.msra.mxu0 0.0
        %627 = vmatprep.subr.mxu0 0.0
        %628 = vmatpush1.xpose.msra.mxu0 0.0
        %629 = vmatprep.subr.mxu0 0.0
        %630 = vmatpush1.xpose.msra.mxu0 0.0
        %631 = vmatprep.subr.mxu0 0.0
        %632 = vmatpush1.xpose.msra.mxu0 0.0
        %633 = vmatprep.subr.mxu0 0.0
        %634 = vmatpush1.xpose.msra.mxu0 0.0
        %635 = vmatprep.subr.mxu0 0.0
        %636 = vmatpush1.xpose.msra.mxu0 0.0
        %637 = vmatprep.mubr.f32.mxu0 0.0
        %638 = vmatmul.mubr.f32.gmra.mrb[0].mxu0 %v569
        %v639 = vpop.f32.mrb[0].mxu0
        %v640 = vadd.f32 0.0, %v639
        %v641 = vpop.f32.mrb[0].mxu0
        %642 = vdwg.mxu0
        %v643 = vmul.f32 %v640, 0.35355338
        %v644 = vadd.f32 %v643, %v563
        %v645 = vsel %vm568, %v644, -inf
        %646 = vmax.xlane.f32.xlu0 %v645
        %v647 = vpop.xlane.xlu0 %646
        %v648 = vsub.f32 %v644, %v647
        %v649 = vmul.f32 %v648, 1.442695
        %v650 = vpow.pop %v649
        %v651 = vsel %vm568, %v650, 0.0
        %652 = vadd.xlane.f32.xlu0 %v651
        %v653 = vpop.xlane.xlu0 %652
        %v654 = vrcp.pop %v653
        %v655 = vmul.f32 %v653, %v654
        %v656 = vsub.f32 2.0, %v655
        %v657 = vmul.f32 %v654, %v656
        %v658 = vmul.f32 %v650, %v657
        %v659 = vadd.f32 %v658, 0.0
        %660 = vrot.lane.b32.xlu0 %v555, 64
        %v661 = vpop.permute.xlu0 %660
        %v664 = vsel %vm568, %v658, 0
        %666 = vmatprep.subr.mxu0 0.0
        %667 = vmatpush1.msra.mxu0 %v661
        %668 = vmatprep.subr.mxu0 0.0
        %669 = vmatpush1.msra.mxu0 0.0
        %670 = vmatprep.subr.mxu0 0.0
        %671 = vmatpush1.msra.mxu0 0.0
        %672 = vmatprep.subr.mxu0 0.0
        %673 = vmatpush1.msra.mxu0 0.0
        %674 = vmatprep.subr.mxu0 0.0
        %675 = vmatpush1.msra.mxu0 0.0
        %676 = vmatprep.subr.mxu0 0.0
        %677 = vmatpush1.msra.mxu0 0.0
        %678 = vmatprep.subr.mxu0 0.0
        %679 = vmatpush1.msra.mxu0 0.0
        %680 = vmatprep.subr.mxu0 0.0
        %681 = vmatpush1.msra.mxu0 0.0
        %682 = vmatprep.subr.mxu0 0.0
        %683 = vmatpush1.msra.mxu0 0.0
        %684 = vmatprep.subr.mxu0 0.0
        %685 = vmatpush1.msra.mxu0 0.0
        %686 = vmatprep.subr.mxu0 0.0
        %687 = vmatpush1.msra.mxu0 0.0
        %688 = vmatprep.subr.mxu0 0.0
        %689 = vmatpush1.msra.mxu0 0.0
        %690 = vmatprep.subr.mxu0 0.0
        %691 = vmatpush1.msra.mxu0 0.0
        %692 = vmatprep.subr.mxu0 0.0
        %693 = vmatpush1.msra.mxu0 0.0
        %694 = vmatprep.subr.mxu0 0.0
        %695 = vmatpush1.msra.mxu0 0.0
        %696 = vmatprep.subr.mxu0 0.0
        %697 = vmatpush1.msra.mxu0 0.0
        %698 = vmatprep.subr.mxu0 0.0
        %699 = vmatpush1.msra.mxu0 0.0
        %700 = vmatprep.subr.mxu0 0.0
        %701 = vmatpush1.msra.mxu0 0.0
        %702 = vmatprep.subr.mxu0 0.0
        %703 = vmatpush1.msra.mxu0 0.0
        %704 = vmatprep.subr.mxu0 0.0
        %705 = vmatpush1.msra.mxu0 0.0
        %706 = vmatprep.subr.mxu0 0.0
        %707 = vmatpush1.msra.mxu0 0.0
        %708 = vmatprep.subr.mxu0 0.0
        %709 = vmatpush1.msra.mxu0 0.0
        %710 = vmatprep.subr.mxu0 0.0
        %711 = vmatpush1.msra.mxu0 0.0
        %712 = vmatprep.subr.mxu0 0.0
        %713 = vmatpush1.msra.mxu0 0.0
        %714 = vmatprep.subr.mxu0 0.0
        %715 = vmatpush1.msra.mxu0 0.0
        %716 = vmatprep.subr.mxu0 0.0
        %717 = vmatpush1.msra.mxu0 0.0
        %718 = vmatprep.subr.mxu0 0.0
        %719 = vmatpush1.msra.mxu0 0.0
        %720 = vmatprep.subr.mxu0 0.0
        %721 = vmatpush1.msra.mxu0 0.0
        %722 = vmatprep.subr.mxu0 0.0
        %723 = vmatpush1.msra.mxu0 0.0
        %724 = vmatprep.subr.mxu0 0.0
        %725 = vmatpush1.msra.mxu0 0.0
        %726 = vmatprep.subr.mxu0 0.0
        %727 = vmatpush1.msra.mxu0 0.0
        %728 = vmatprep.subr.mxu0 0.0
        %729 = vmatpush1.msra.mxu0 0.0
        %730 = vmatprep.mubr.f32.mxu0 0.0
        %731 = vmatmul.mubr.f32.gmra.mrb[0].mxu0 %v664
        %v732 = vpop.f32.mrb[0].mxu0
        %v733 = vadd.f32 0.0, %v732
        %v734 = vpop.f32.mrb[0].mxu0
        %735 = vdwg.mxu0
        %736 = vst.msk [vmem:[#allocation2] sm:$0xff] %vm568, %v733
        %737 = vrot.lane.b32.xlu0 %v555, 120
        %v738 = vpop.permute.xlu0 %737
        %739 = vrot.lane.b32.xlu0 %v555, 88
        %v740 = vpop.permute.xlu0 %739
        %v741 = vsel %vm568, %v738, 0
        %v743 = vsel %vm568, %v740, 0
        %745 = vmatprep.subr.mxu0 0.0
        %746 = vmatpush1.xpose.msra.mxu0 %v743
        %747 = vmatprep.subr.mxu0 0.0
        %748 = vmatpush1.xpose.msra.mxu0 0.0
        %749 = vmatprep.subr.mxu0 0.0
        %750 = vmatpush1.xpose.msra.mxu0 0.0
        %751 = vmatprep.subr.mxu0 0.0
        %752 = vmatpush1.xpose.msra.mxu0 0.0
        %753 = vmatprep.subr.mxu0 0.0
        %754 = vmatpush1.xpose.msra.mxu0 0.0
        %755 = vmatprep.subr.mxu0 0.0
        %756 = vmatpush1.xpose.msra.mxu0 0.0
        %757 = vmatprep.subr.mxu0 0.0
        %758 = vmatpush1.xpose.msra.mxu0 0.0
        %759 = vmatprep.subr.mxu0 0.0
        %760 = vmatpush1.xpose.msra.mxu0 0.0
        %761 = vmatprep.subr.mxu0 0.0
        %762 = vmatpush1.xpose.msra.mxu0 0.0
        %763 = vmatprep.subr.mxu0 0.0
        %764 = vmatpush1.xpose.msra.mxu0 0.0
        %765 = vmatprep.subr.mxu0 0.0
        %766 = vmatpush1.xpose.msra.mxu0 0.0
        %767 = vmatprep.subr.mxu0 0.0
        %768 = vmatpush1.xpose.msra.mxu0 0.0
        %769 = vmatprep.subr.mxu0 0.0
        %770 = vmatpush1.xpose.msra.mxu0 0.0
        %771 = vmatprep.subr.mxu0 0.0
        %772 = vmatpush1.xpose.msra.mxu0 0.0
        %773 = vmatprep.subr.mxu0 0.0
        %774 = vmatpush1.xpose.msra.mxu0 0.0
        %775 = vmatprep.subr.mxu0 0.0
        %776 = vmatpush1.xpose.msra.mxu0 0.0
        %777 = vmatprep.subr.mxu0 0.0
        %778 = vmatpush1.xpose.msra.mxu0 0.0
        %779 = vmatprep.subr.mxu0 0.0
        %780 = vmatpush1.xpose.msra.mxu0 0.0
        %781 = vmatprep.subr.mxu0 0.0
        %782 = vmatpush1.xpose.msra.mxu0 0.0
        %783 = vmatprep.subr.mxu0 0.0
        %784 = vmatpush1.xpose.msra.mxu0 0.0
        %785 = vmatprep.subr.mxu0 0.0
        %786 = vmatpush1.xpose.msra.mxu0 0.0
        %787 = vmatprep.subr.mxu0 0.0
        %788 = vmatpush1.xpose.msra.mxu0 0.0
        %789 = vmatprep.subr.mxu0 0.0
        %790 = vmatpush1.xpose.msra.mxu0 0.0
        %791 = vmatprep.subr.mxu0 0.0
        %792 = vmatpush1.xpose.msra.mxu0 0.0
        %793 = vmatprep.subr.mxu0 0.0
        %794 = vmatpush1.xpose.msra.mxu0 0.0
        %795 = vmatprep.subr.mxu0 0.0
        %796 = vmatpush1.xpose.msra.mxu0 0.0
        %797 = vmatprep.subr.mxu0 0.0
        %798 = vmatpush1.xpose.msra.mxu0 0.0
        %799 = vmatprep.subr.mxu0 0.0
        %800 = vmatpush1.xpose.msra.mxu0 0.0
        %801 = vmatprep.subr.mxu0 0.0
        %802 = vmatpush1.xpose.msra.mxu0 0.0
        %803 = vmatprep.subr.mxu0 0.0
        %804 = vmatpush1.xpose.msra.mxu0 0.0
        %805 = vmatprep.subr.mxu0 0.0
        %806 = vmatpush1.xpose.msra.mxu0 0.0
        %807 = vmatprep.subr.mxu0 0.0
        %808 = vmatpush1.xpose.msra.mxu0 0.0
        %809 = vmatprep.mubr.f32.mxu0 0.0
        %810 = vmatmul.mubr.f32.gmra.mrb[0].mxu0 %v741
        %v811 = vpop.f32.mrb[0].mxu0
        %v812 = vadd.f32 0.0, %v811
        %v813 = vpop.f32.mrb[0].mxu0
        %814 = vdwg.mxu0
        %v815 = vmul.f32 %v812, 0.35355338
        %v816 = vadd.f32 %v815, %v563
        %v817 = vsel %vm568, %v816, -inf
        %818 = vmax.xlane.f32.xlu0 %v817
        %v819 = vpop.xlane.xlu0 %818
        %v820 = vsub.f32 %v816, %v819
        %v821 = vmul.f32 %v820, 1.442695
        %v822 = vpow.pop %v821
        %v823 = vsel %vm568, %v822, 0.0
        %824 = vadd.xlane.f32.xlu0 %v823
        %v825 = vpop.xlane.xlu0 %824
        %v826 = vrcp.pop %v825
        %v827 = vmul.f32 %v825, %v826
        %v828 = vsub.f32 2.0, %v827
        %v829 = vmul.f32 %v826, %v828
        %v830 = vmul.f32 %v822, %v829
        %v831 = vadd.f32 %v659, %v830
        %832 = vrot.lane.b32.xlu0 %v555, 56
        %v833 = vpop.permute.xlu0 %832
        %v836 = vsel %vm568, %v830, 0
        %838 = vmatprep.subr.mxu0 0.0
        %839 = vmatpush1.msra.mxu0 %v833
        %840 = vmatprep.subr.mxu0 0.0
        %841 = vmatpush1.msra.mxu0 0.0
        %842 = vmatprep.subr.mxu0 0.0
        %843 = vmatpush1.msra.mxu0 0.0
        %844 = vmatprep.subr.mxu0 0.0
        %845 = vmatpush1.msra.mxu0 0.0
        %846 = vmatprep.subr.mxu0 0.0
        %847 = vmatpush1.msra.mxu0 0.0
        %848 = vmatprep.subr.mxu0 0.0
        %849 = vmatpush1.msra.mxu0 0.0
        %850 = vmatprep.subr.mxu0 0.0
        %851 = vmatpush1.msra.mxu0 0.0
        %852 = vmatprep.subr.mxu0 0.0
        %853 = vmatpush1.msra.mxu0 0.0
        %854 = vmatprep.subr.mxu0 0.0
        %855 = vmatpush1.msra.mxu0 0.0
        %856 = vmatprep.subr.mxu0 0.0
        %857 = vmatpush1.msra.mxu0 0.0
        %858 = vmatprep.subr.mxu0 0.0
        %859 = vmatpush1.msra.mxu0 0.0
        %860 = vmatprep.subr.mxu0 0.0
        %861 = vmatpush1.msra.mxu0 0.0
        %862 = vmatprep.subr.mxu0 0.0
        %863 = vmatpush1.msra.mxu0 0.0
        %864 = vmatprep.subr.mxu0 0.0
        %865 = vmatpush1.msra.mxu0 0.0
        %866 = vmatprep.subr.mxu0 0.0
        %867 = vmatpush1.msra.mxu0 0.0
        %868 = vmatprep.subr.mxu0 0.0
        %869 = vmatpush1.msra.mxu0 0.0
        %870 = vmatprep.subr.mxu0 0.0
        %871 = vmatpush1.msra.mxu0 0.0
        %872 = vmatprep.subr.mxu0 0.0
        %873 = vmatpush1.msra.mxu0 0.0
        %874 = vmatprep.subr.mxu0 0.0
        %875 = vmatpush1.msra.mxu0 0.0
        %876 = vmatprep.subr.mxu0 0.0
        %877 = vmatpush1.msra.mxu0 0.0
        %878 = vmatprep.subr.mxu0 0.0
        %879 = vmatpush1.msra.mxu0 0.0
        %880 = vmatprep.subr.mxu0 0.0
        %881 = vmatpush1.msra.mxu0 0.0
        %882 = vmatprep.subr.mxu0 0.0
        %883 = vmatpush1.msra.mxu0 0.0
        %884 = vmatprep.subr.mxu0 0.0
        %885 = vmatpush1.msra.mxu0 0.0
        %886 = vmatprep.subr.mxu0 0.0
        %887 = vmatpush1.msra.mxu0 0.0
        %888 = vmatprep.subr.mxu0 0.0
        %889 = vmatpush1.msra.mxu0 0.0
        %890 = vmatprep.subr.mxu0 0.0
        %891 = vmatpush1.msra.mxu0 0.0
        %892 = vmatprep.subr.mxu0 0.0
        %893 = vmatpush1.msra.mxu0 0.0
        %894 = vmatprep.subr.mxu0 0.0
        %895 = vmatpush1.msra.mxu0 0.0
        %896 = vmatprep.subr.mxu0 0.0
        %897 = vmatpush1.msra.mxu0 0.0
        %898 = vmatprep.subr.mxu0 0.0
        %899 = vmatpush1.msra.mxu0 0.0
        %900 = vmatprep.subr.mxu0 0.0
        %901 = vmatpush1.msra.mxu0 0.0
        %902 = vmatprep.mubr.f32.mxu0 0.0
        %903 = vmatmul.mubr.f32.gmra.mrb[0].mxu0 %v836
        %v904 = vpop.f32.mrb[0].mxu0
        %v905 = vadd.f32 0.0, %v904
        %v906 = vpop.f32.mrb[0].mxu0
        %907 = vdwg.mxu0
        %909 = vrot.lane.b32.xlu0 %v905, 8
        %v910 = vpop.permute.xlu0 %909
        %vm912 = vcmask 130112
        %913 = vst.msk [vmem:[#allocation2] sm:$0xff] %vm912, %v910
        %914 = vrot.lane.b32.xlu0 %v555, 112
        %v915 = vpop.permute.xlu0 %914
        %916 = vrot.lane.b32.xlu0 %v555, 80
        %v917 = vpop.permute.xlu0 %916
        %v918 = vsel %vm568, %v915, 0
        %v920 = vsel %vm568, %v917, 0
        %922 = vmatprep.subr.mxu0 0.0
        %923 = vmatpush1.xpose.msra.mxu0 %v920
        %924 = vmatprep.subr.mxu0 0.0
        %925 = vmatpush1.xpose.msra.mxu0 0.0
        %926 = vmatprep.subr.mxu0 0.0
        %927 = vmatpush1.xpose.msra.mxu0 0.0
        %928 = vmatprep.subr.mxu0 0.0
        %929 = vmatpush1.xpose.msra.mxu0 0.0
        %930 = vmatprep.subr.mxu0 0.0
        %931 = vmatpush1.xpose.msra.mxu0 0.0
        %932 = vmatprep.subr.mxu0 0.0
        %933 = vmatpush1.xpose.msra.mxu0 0.0
        %934 = vmatprep.subr.mxu0 0.0
        %935 = vmatpush1.xpose.msra.mxu0 0.0
        %936 = vmatprep.subr.mxu0 0.0
        %937 = vmatpush1.xpose.msra.mxu0 0.0
        %938 = vmatprep.subr.mxu0 0.0
        %939 = vmatpush1.xpose.msra.mxu0 0.0
        %940 = vmatprep.subr.mxu0 0.0
        %941 = vmatpush1.xpose.msra.mxu0 0.0
        %942 = vmatprep.subr.mxu0 0.0
        %943 = vmatpush1.xpose.msra.mxu0 0.0
        %944 = vmatprep.subr.mxu0 0.0
        %945 = vmatpush1.xpose.msra.mxu0 0.0
        %946 = vmatprep.subr.mxu0 0.0
        %947 = vmatpush1.xpose.msra.mxu0 0.0
        %948 = vmatprep.subr.mxu0 0.0
        %949 = vmatpush1.xpose.msra.mxu0 0.0
        %950 = vmatprep.subr.mxu0 0.0
        %951 = vmatpush1.xpose.msra.mxu0 0.0
        %952 = vmatprep.subr.mxu0 0.0
        %953 = vmatpush1.xpose.msra.mxu0 0.0
        %954 = vmatprep.subr.mxu0 0.0
        %955 = vmatpush1.xpose.msra.mxu0 0.0
        %956 = vmatprep.subr.mxu0 0.0
        %957 = vmatpush1.xpose.msra.mxu0 0.0
        %958 = vmatprep.subr.mxu0 0.0
        %959 = vmatpush1.xpose.msra.mxu0 0.0
        %960 = vmatprep.subr.mxu0 0.0
        %961 = vmatpush1.xpose.msra.mxu0 0.0
        %962 = vmatprep.subr.mxu0 0.0
        %963 = vmatpush1.xpose.msra.mxu0 0.0
        %964 = vmatprep.subr.mxu0 0.0
        %965 = vmatpush1.xpose.msra.mxu0 0.0
        %966 = vmatprep.subr.mxu0 0.0
        %967 = vmatpush1.xpose.msra.mxu0 0.0
        %968 = vmatprep.subr.mxu0 0.0
        %969 = vmatpush1.xpose.msra.mxu0 0.0
        %970 = vmatprep.subr.mxu0 0.0
        %971 = vmatpush1.xpose.msra.mxu0 0.0
        %972 = vmatprep.subr.mxu0 0.0
        %973 = vmatpush1.xpose.msra.mxu0 0.0
        %974 = vmatprep.subr.mxu0 0.0
        %975 = vmatpush1.xpose.msra.mxu0 0.0
        %976 = vmatprep.subr.mxu0 0.0
        %977 = vmatpush1.xpose.msra.mxu0 0.0
        %978 = vmatprep.subr.mxu0 0.0
        %979 = vmatpush1.xpose.msra.mxu0 0.0
        %980 = vmatprep.subr.mxu0 0.0
        %981 = vmatpush1.xpose.msra.mxu0 0.0
        %982 = vmatprep.subr.mxu0 0.0
        %983 = vmatpush1.xpose.msra.mxu0 0.0
        %984 = vmatprep.subr.mxu0 0.0
        %985 = vmatpush1.xpose.msra.mxu0 0.0
        %986 = vmatprep.mubr.f32.mxu0 0.0
        %987 = vmatmul.mubr.f32.gmra.mrb[0].mxu0 %v918
        %v988 = vpop.f32.mrb[0].mxu0
        %v989 = vadd.f32 0.0, %v988
        %v990 = vpop.f32.mrb[0].mxu0
        %991 = vdwg.mxu0
        %v992 = vmul.f32 %v989, 0.35355338
        %v993 = vadd.f32 %v992, %v563
        %v994 = vsel %vm568, %v993, -inf
        %995 = vmax.xlane.f32.xlu0 %v994
        %v996 = vpop.xlane.xlu0 %995
        %v997 = vsub.f32 %v993, %v996
        %v998 = vmul.f32 %v997, 1.442695
        %v999 = vpow.pop %v998
        %v1000 = vsel %vm568, %v999, 0.0
        %1001 = vadd.xlane.f32.xlu0 %v1000
        %v1002 = vpop.xlane.xlu0 %1001
        %v1003 = vrcp.pop %v1002
        %v1004 = vmul.f32 %v1002, %v1003
        %v1005 = vsub.f32 2.0, %v1004
        %v1006 = vmul.f32 %v1003, %v1005
        %v1007 = vmul.f32 %v999, %v1006
        %v1008 = vadd.f32 %v831, %v1007
        %1009 = vrot.lane.b32.xlu0 %v555, 48
        %v1010 = vpop.permute.xlu0 %1009
        %v1013 = vsel %vm568, %v1007, 0
        %1015 = vmatprep.subr.mxu0 0.0
        %1016 = vmatpush1.msra.mxu0 %v1010
        %1017 = vmatprep.subr.mxu0 0.0
        %1018 = vmatpush1.msra.mxu0 0.0
        %1019 = vmatprep.subr.mxu0 0.0
        %1020 = vmatpush1.msra.mxu0 0.0
        %1021 = vmatprep.subr.mxu0 0.0
        %1022 = vmatpush1.msra.mxu0 0.0
        %1023 = vmatprep.subr.mxu0 0.0
        %1024 = vmatpush1.msra.mxu0 0.0
        %1025 = vmatprep.subr.mxu0 0.0
        %1026 = vmatpush1.msra.mxu0 0.0
        %1027 = vmatprep.subr.mxu0 0.0
        %1028 = vmatpush1.msra.mxu0 0.0
        %1029 = vmatprep.subr.mxu0 0.0
        %1030 = vmatpush1.msra.mxu0 0.0
        %1031 = vmatprep.subr.mxu0 0.0
        %1032 = vmatpush1.msra.mxu0 0.0
        %1033 = vmatprep.subr.mxu0 0.0
        %1034 = vmatpush1.msra.mxu0 0.0
        %1035 = vmatprep.subr.mxu0 0.0
        %1036 = vmatpush1.msra.mxu0 0.0
        %1037 = vmatprep.subr.mxu0 0.0
        %1038 = vmatpush1.msra.mxu0 0.0
        %1039 = vmatprep.subr.mxu0 0.0
        %1040 = vmatpush1.msra.mxu0 0.0
        %1041 = vmatprep.subr.mxu0 0.0
        %1042 = vmatpush1.msra.mxu0 0.0
        %1043 = vmatprep.subr.mxu0 0.0
        %1044 = vmatpush1.msra.mxu0 0.0
        %1045 = vmatprep.subr.mxu0 0.0
        %1046 = vmatpush1.msra.mxu0 0.0
        %1047 = vmatprep.subr.mxu0 0.0
        %1048 = vmatpush1.msra.mxu0 0.0
        %1049 = vmatprep.subr.mxu0 0.0
        %1050 = vmatpush1.msra.mxu0 0.0
        %1051 = vmatprep.subr.mxu0 0.0
        %1052 = vmatpush1.msra.mxu0 0.0
        %1053 = vmatprep.subr.mxu0 0.0
        %1054 = vmatpush1.msra.mxu0 0.0
        %1055 = vmatprep.subr.mxu0 0.0
        %1056 = vmatpush1.msra.mxu0 0.0
        %1057 = vmatprep.subr.mxu0 0.0
        %1058 = vmatpush1.msra.mxu0 0.0
        %1059 = vmatprep.subr.mxu0 0.0
        %1060 = vmatpush1.msra.mxu0 0.0
        %1061 = vmatprep.subr.mxu0 0.0
        %1062 = vmatpush1.msra.mxu0 0.0
        %1063 = vmatprep.subr.mxu0 0.0
        %1064 = vmatpush1.msra.mxu0 0.0
        %1065 = vmatprep.subr.mxu0 0.0
        %1066 = vmatpush1.msra.mxu0 0.0
        %1067 = vmatprep.subr.mxu0 0.0
        %1068 = vmatpush1.msra.mxu0 0.0
        %1069 = vmatprep.subr.mxu0 0.0
        %1070 = vmatpush1.msra.mxu0 0.0
        %1071 = vmatprep.subr.mxu0 0.0
        %1072 = vmatpush1.msra.mxu0 0.0
        %1073 = vmatprep.subr.mxu0 0.0
        %1074 = vmatpush1.msra.mxu0 0.0
        %1075 = vmatprep.subr.mxu0 0.0
        %1076 = vmatpush1.msra.mxu0 0.0
        %1077 = vmatprep.subr.mxu0 0.0
        %1078 = vmatpush1.msra.mxu0 0.0
        %1079 = vmatprep.mubr.f32.mxu0 0.0
        %1080 = vmatmul.mubr.f32.gmra.mrb[0].mxu0 %v1013
        %v1081 = vpop.f32.mrb[0].mxu0
        %v1082 = vadd.f32 0.0, %v1081
        %v1083 = vpop.f32.mrb[0].mxu0
        %1084 = vdwg.mxu0
        %1086 = vrot.lane.b32.xlu0 %v1082, 16
        %v1087 = vpop.permute.xlu0 %1086
        %vm1089 = vcmask 195712
        %1090 = vst.msk [vmem:[#allocation2] sm:$0xff] %vm1089, %v1087
        %1091 = vrot.lane.b32.xlu0 %v555, 104
        %v1092 = vpop.permute.xlu0 %1091
        %1093 = vrot.lane.b32.xlu0 %v555, 72
        %v1094 = vpop.permute.xlu0 %1093
        %v1095 = vsel %vm568, %v1092, 0
        %v1097 = vsel %vm568, %v1094, 0
        %1099 = vmatprep.subr.mxu0 0.0
        %1100 = vmatpush1.xpose.msra.mxu0 %v1097
        %1101 = vmatprep.subr.mxu0 0.0
        %1102 = vmatpush1.xpose.msra.mxu0 0.0
        %1103 = vmatprep.subr.mxu0 0.0
        %1104 = vmatpush1.xpose.msra.mxu0 0.0
        %1105 = vmatprep.subr.mxu0 0.0
        %1106 = vmatpush1.xpose.msra.mxu0 0.0
        %1107 = vmatprep.subr.mxu0 0.0
        %1108 = vmatpush1.xpose.msra.mxu0 0.0
        %1109 = vmatprep.subr.mxu0 0.0
        %1110 = vmatpush1.xpose.msra.mxu0 0.0
        %1111 = vmatprep.subr.mxu0 0.0
        %1112 = vmatpush1.xpose.msra.mxu0 0.0
        %1113 = vmatprep.subr.mxu0 0.0
        %1114 = vmatpush1.xpose.msra.mxu0 0.0
        %1115 = vmatprep.subr.mxu0 0.0
        %1116 = vmatpush1.xpose.msra.mxu0 0.0
        %1117 = vmatprep.subr.mxu0 0.0
        %1118 = vmatpush1.xpose.msra.mxu0 0.0
        %1119 = vmatprep.subr.mxu0 0.0
        %1120 = vmatpush1.xpose.msra.mxu0 0.0
        %1121 = vmatprep.subr.mxu0 0.0
        %1122 = vmatpush1.xpose.msra.mxu0 0.0
        %1123 = vmatprep.subr.mxu0 0.0
        %1124 = vmatpush1.xpose.msra.mxu0 0.0
        %1125 = vmatprep.subr.mxu0 0.0
        %1126 = vmatpush1.xpose.msra.mxu0 0.0
        %1127 = vmatprep.subr.mxu0 0.0
        %1128 = vmatpush1.xpose.msra.mxu0 0.0
        %1129 = vmatprep.subr.mxu0 0.0
        %1130 = vmatpush1.xpose.msra.mxu0 0.0
        %1131 = vmatprep.subr.mxu0 0.0
        %1132 = vmatpush1.xpose.msra.mxu0 0.0
        %1133 = vmatprep.subr.mxu0 0.0
        %1134 = vmatpush1.xpose.msra.mxu0 0.0
        %1135 = vmatprep.subr.mxu0 0.0
        %1136 = vmatpush1.xpose.msra.mxu0 0.0
        %1137 = vmatprep.subr.mxu0 0.0
        %1138 = vmatpush1.xpose.msra.mxu0 0.0
        %1139 = vmatprep.subr.mxu0 0.0
        %1140 = vmatpush1.xpose.msra.mxu0 0.0
        %1141 = vmatprep.subr.mxu0 0.0
        %1142 = vmatpush1.xpose.msra.mxu0 0.0
        %1143 = vmatprep.subr.mxu0 0.0
        %1144 = vmatpush1.xpose.msra.mxu0 0.0
        %1145 = vmatprep.subr.mxu0 0.0
        %1146 = vmatpush1.xpose.msra.mxu0 0.0
        %1147 = vmatprep.subr.mxu0 0.0
        %1148 = vmatpush1.xpose.msra.mxu0 0.0
        %1149 = vmatprep.subr.mxu0 0.0
        %1150 = vmatpush1.xpose.msra.mxu0 0.0
        %1151 = vmatprep.subr.mxu0 0.0
        %1152 = vmatpush1.xpose.msra.mxu0 0.0
        %1153 = vmatprep.subr.mxu0 0.0
        %1154 = vmatpush1.xpose.msra.mxu0 0.0
        %1155 = vmatprep.subr.mxu0 0.0
        %1156 = vmatpush1.xpose.msra.mxu0 0.0
        %1157 = vmatprep.subr.mxu0 0.0
        %1158 = vmatpush1.xpose.msra.mxu0 0.0
        %1159 = vmatprep.subr.mxu0 0.0
        %1160 = vmatpush1.xpose.msra.mxu0 0.0
        %1161 = vmatprep.subr.mxu0 0.0
        %1162 = vmatpush1.xpose.msra.mxu0 0.0
        %1163 = vmatprep.mubr.f32.mxu0 0.0
        %1164 = vmatmul.mubr.f32.gmra.mrb[0].mxu0 %v1095
        %v1165 = vpop.f32.mrb[0].mxu0
        %v1166 = vadd.f32 0.0, %v1165
        %v1167 = vpop.f32.mrb[0].mxu0
        %1168 = vdwg.mxu0
        %v1169 = vmul.f32 %v1166, 0.35355338
        %v1170 = vadd.f32 %v1169, %v563
        %v1171 = vsel %vm568, %v1170, -inf
        %1172 = vmax.xlane.f32.xlu0 %v1171
        %v1173 = vpop.xlane.xlu0 %1172
        %v1174 = vsub.f32 %v1170, %v1173
        %v1175 = vmul.f32 %v1174, 1.442695
        %v1176 = vpow.pop %v1175
        %v1177 = vsel %vm568, %v1176, 0.0
        %1178 = vadd.xlane.f32.xlu0 %v1177
        %v1179 = vpop.xlane.xlu0 %1178
        %v1180 = vrcp.pop %v1179
        %v1181 = vmul.f32 %v1179, %v1180
        %v1182 = vsub.f32 2.0, %v1181
        %v1183 = vmul.f32 %v1180, %v1182
        %v1184 = vmul.f32 %v1176, %v1183
        %v1185 = vadd.f32 %v1008, %v1184
        %1186 = vrot.lane.b32.xlu0 %v555, 40
        %v1187 = vpop.permute.xlu0 %1186
        %v1190 = vsel %vm568, %v1184, 0
        %1192 = vmatprep.subr.mxu0 0.0
        %1193 = vmatpush1.msra.mxu0 %v1187
        %1194 = vmatprep.subr.mxu0 0.0
        %1195 = vmatpush1.msra.mxu0 0.0
        %1196 = vmatprep.subr.mxu0 0.0
        %1197 = vmatpush1.msra.mxu0 0.0
        %1198 = vmatprep.subr.mxu0 0.0
        %1199 = vmatpush1.msra.mxu0 0.0
        %1200 = vmatprep.subr.mxu0 0.0
        %1201 = vmatpush1.msra.mxu0 0.0
        %1202 = vmatprep.subr.mxu0 0.0
        %1203 = vmatpush1.msra.mxu0 0.0
        %1204 = vmatprep.subr.mxu0 0.0
        %1205 = vmatpush1.msra.mxu0 0.0
        %1206 = vmatprep.subr.mxu0 0.0
        %1207 = vmatpush1.msra.mxu0 0.0
        %1208 = vmatprep.subr.mxu0 0.0
        %1209 = vmatpush1.msra.mxu0 0.0
        %1210 = vmatprep.subr.mxu0 0.0
        %1211 = vmatpush1.msra.mxu0 0.0
        %1212 = vmatprep.subr.mxu0 0.0
        %1213 = vmatpush1.msra.mxu0 0.0
        %1214 = vmatprep.subr.mxu0 0.0
        %1215 = vmatpush1.msra.mxu0 0.0
        %1216 = vmatprep.subr.mxu0 0.0
        %1217 = vmatpush1.msra.mxu0 0.0
        %1218 = vmatprep.subr.mxu0 0.0
        %1219 = vmatpush1.msra.mxu0 0.0
        %1220 = vmatprep.subr.mxu0 0.0
        %1221 = vmatpush1.msra.mxu0 0.0
        %1222 = vmatprep.subr.mxu0 0.0
        %1223 = vmatpush1.msra.mxu0 0.0
        %1224 = vmatprep.subr.mxu0 0.0
        %1225 = vmatpush1.msra.mxu0 0.0
        %1226 = vmatprep.subr.mxu0 0.0
        %1227 = vmatpush1.msra.mxu0 0.0
        %1228 = vmatprep.subr.mxu0 0.0
        %1229 = vmatpush1.msra.mxu0 0.0
        %1230 = vmatprep.subr.mxu0 0.0
        %1231 = vmatpush1.msra.mxu0 0.0
        %1232 = vmatprep.subr.mxu0 0.0
        %1233 = vmatpush1.msra.mxu0 0.0
        %1234 = vmatprep.subr.mxu0 0.0
        %1235 = vmatpush1.msra.mxu0 0.0
        %1236 = vmatprep.subr.mxu0 0.0
        %1237 = vmatpush1.msra.mxu0 0.0
        %1238 = vmatprep.subr.mxu0 0.0
        %1239 = vmatpush1.msra.mxu0 0.0
        %1240 = vmatprep.subr.mxu0 0.0
        %1241 = vmatpush1.msra.mxu0 0.0
        %1242 = vmatprep.subr.mxu0 0.0
        %1243 = vmatpush1.msra.mxu0 0.0
        %1244 = vmatprep.subr.mxu0 0.0
        %1245 = vmatpush1.msra.mxu0 0.0
        %1246 = vmatprep.subr.mxu0 0.0
        %1247 = vmatpush1.msra.mxu0 0.0
        %1248 = vmatprep.subr.mxu0 0.0
        %1249 = vmatpush1.msra.mxu0 0.0
        %1250 = vmatprep.subr.mxu0 0.0
        %1251 = vmatpush1.msra.mxu0 0.0
        %1252 = vmatprep.subr.mxu0 0.0
        %1253 = vmatpush1.msra.mxu0 0.0
        %1254 = vmatprep.subr.mxu0 0.0
        %1255 = vmatpush1.msra.mxu0 0.0
        %1256 = vmatprep.mubr.f32.mxu0 0.0
        %1257 = vmatmul.mubr.f32.gmra.mrb[0].mxu0 %v1190
        %v1258 = vpop.f32.mrb[0].mxu0
        %v1259 = vadd.f32 0.0, %v1258
        %v1260 = vpop.f32.mrb[0].mxu0
        %1261 = vdwg.mxu0
        %1263 = vrot.lane.b32.xlu0 %v1259, 24
        %v1264 = vpop.permute.xlu0 %1263
        %vm1266 = vcmask 261312
        %1267 = vst.msk [vmem:[#allocation2] sm:$0xff] %vm1266, %v1264
        %v1268 = vld [vmem:[#allocation2] sm:$0xff]
        %v1269 = vld [vmem:[#allocation11] sm:$0xff]
        %v1270 = vld [vmem:[#allocation11 + $0x8] sm:$0xff]
        %v1271 = vld [vmem:[#allocation11 + $0x10] sm:$0xff]
        %v1272 = vld [vmem:[#allocation11 + $0x18] sm:$0xff]
        %v1273 = vld [vmem:[#allocation12] sm:$0x1]
        %v1275 = vlaneseq
        %v1276 = vshrl.u32 %v1275, 7
        %v1277 = vsub.s32 0, %v1276
        %v1278 = vrot.slane %v1273, %v1277
        %v1281 = vsel %vm484, %v1268, 0
        %1283 = vmatprep.subr.mxu0 0.0
        %1284 = vmatpush1.msra.mxu0 %v1269
        %1285 = vmatprep.subr.mxu0 0.0
        %1286 = vmatpush1.msra.mxu0 %v1270
        %1287 = vmatprep.subr.mxu0 0.0
        %1288 = vmatpush1.msra.mxu0 %v1271
        %1289 = vmatprep.subr.mxu0 0.0
        %1290 = vmatpush1.msra.mxu0 %v1272
        %1291 = vmatprep.subr.mxu0 0.0
        %1292 = vmatpush1.msra.mxu0 0.0
        %1293 = vmatprep.subr.mxu0 0.0
        %1294 = vmatpush1.msra.mxu0 0.0
        %1295 = vmatprep.subr.mxu0 0.0
        %1296 = vmatpush1.msra.mxu0 0.0
        %1297 = vmatprep.subr.mxu0 0.0
        %1298 = vmatpush1.msra.mxu0 0.0
        %1299 = vmatprep.subr.mxu0 0.0
        %1300 = vmatpush1.msra.mxu0 0.0
        %1301 = vmatprep.subr.mxu0 0.0
        %1302 = vmatpush1.msra.mxu0 0.0
        %1303 = vmatprep.subr.mxu0 0.0
        %1304 = vmatpush1.msra.mxu0 0.0
        %1305 = vmatprep.subr.mxu0 0.0
        %1306 = vmatpush1.msra.mxu0 0.0
        %1307 = vmatprep.subr.mxu0 0.0
        %1308 = vmatpush1.msra.mxu0 0.0
        %1309 = vmatprep.subr.mxu0 0.0
        %1310 = vmatpush1.msra.mxu0 0.0
        %1311 = vmatprep.subr.mxu0 0.0
        %1312 = vmatpush1.msra.mxu0 0.0
        %1313 = vmatprep.subr.mxu0 0.0
        %1314 = vmatpush1.msra.mxu0 0.0
        %1315 = vmatprep.subr.mxu0 0.0
        %1316 = vmatpush1.msra.mxu0 0.0
        %1317 = vmatprep.subr.mxu0 0.0
        %1318 = vmatpush1.msra.mxu0 0.0
        %1319 = vmatprep.subr.mxu0 0.0
        %1320 = vmatpush1.msra.mxu0 0.0
        %1321 = vmatprep.subr.mxu0 0.0
        %1322 = vmatpush1.msra.mxu0 0.0
        %1323 = vmatprep.subr.mxu0 0.0
        %1324 = vmatpush1.msra.mxu0 0.0
        %1325 = vmatprep.subr.mxu0 0.0
        %1326 = vmatpush1.msra.mxu0 0.0
        %1327 = vmatprep.subr.mxu0 0.0
        %1328 = vmatpush1.msra.mxu0 0.0
        %1329 = vmatprep.subr.mxu0 0.0
        %1330 = vmatpush1.msra.mxu0 0.0
        %1331 = vmatprep.subr.mxu0 0.0
        %1332 = vmatpush1.msra.mxu0 0.0
        %1333 = vmatprep.subr.mxu0 0.0
        %1334 = vmatpush1.msra.mxu0 0.0
        %1335 = vmatprep.subr.mxu0 0.0
        %1336 = vmatpush1.msra.mxu0 0.0
        %1337 = vmatprep.subr.mxu0 0.0
        %1338 = vmatpush1.msra.mxu0 0.0
        %1339 = vmatprep.subr.mxu0 0.0
        %1340 = vmatpush1.msra.mxu0 0.0
        %1341 = vmatprep.subr.mxu0 0.0
        %1342 = vmatpush1.msra.mxu0 0.0
        %1343 = vmatprep.subr.mxu0 0.0
        %1344 = vmatpush1.msra.mxu0 0.0
        %1345 = vmatprep.subr.mxu0 0.0
        %1346 = vmatpush1.msra.mxu0 0.0
        %1347 = vmatprep.mubr.f32.mxu0 0.0
        %1348 = vmatmul.mubr.f32.gmra.mrb[0].mxu0 %v1281
        %v1349 = vpop.f32.mrb[0].mxu0
        %v1350 = vadd.f32 %v1278, %v1349
        %v1351 = vpop.f32.mrb[0].mxu0
        %1352 = vdwg.mxu0
        %v1353 = vadd.f32 %v1350, %v472
        %v1354 = vsel %vm484, %v1353, 0.0
        %1355 = vadd.xlane.f32.xlu0 %v1354
        %v1356 = vpop.xlane.xlu0 %1355
        %v1357 = vrcp.pop 32.0
        %v1358 = vmul.f32 %v1356, %v1357
        %v1359 = vsub.f32 %v1353, %v1358
        %v1360 = vmul.f32 %v1359, %v1359
        %v1361 = vsel %vm484, %v1360, 0.0
        %1362 = vadd.xlane.f32.xlu0 %v1361
        %v1363 = vpop.xlane.xlu0 %1362
        %v1364 = vmul.f32 %v1363, %v1357
        %v1365 = vadd.f32 %v1364, 1e-05
        %v1366 = vrsqrt.pop %v1365
        %v1367 = vmul.f32 %v1359, %v1366
        %v1368 = vld [vmem:[#allocation14] sm:$0x1]
        %v1370 = vlaneseq
        %v1371 = vshrl.u32 %v1370, 7
        %v1372 = vsub.s32 0, %v1371
        %v1373 = vrot.slane %v1368, %v1372
        %v1375 = vmul.f32 %v1367, %v1373
        %v1376 = vld [vmem:[#allocation15] sm:$0x1]
        %v1378 = vlaneseq
        %v1379 = vshrl.u32 %v1378, 7
        %v1380 = vsub.s32 0, %v1379
        %v1381 = vrot.slane %v1376, %v1380
        %v1383 = vadd.f32 %v1375, %v1381
        %1384 = vst.msk [vmem:[%s464] sm:$0xff] %vm484, %v1383
        %v1385 = vmul.f32 %v1185, 0.25
        %1386 = vst.msk [vmem:[%s471] sm:$0xff] %vm568, %v1385
        %s1387 = sand.u32 %s222, 1
        %s1388 = scalar_lea.sflag [#allocation5], %s1387
        %s1389 = sand.u32 %s222, 1
        %s1390 = smul.addr %s1389, 8
        %s1391 = scalar_lea.vmem [#allocation17], %s1390
        %s1392 = sand.u32 %s248, 1
        %s1393 = scalar_lea.sflag [#allocation19], %s1392
        %s1394 = sand.u32 %s248, 1
        %s1395 = smul.addr %s1394, 8
        %s1396 = scalar_lea.vmem [#allocation18], %s1395
        // Predicated region
        $region85: #{tpu_custom_call.1} parent=51 // pred_check
          %p1397 = pneg %p232
        $region86: #{tpu_custom_call.1} parent=51 // pred_check_branch
          %1399 = sbr.rel (%p1397) target = $region88
        $region87: #{tpu_custom_call.1} parent=51 // pred_region
          %s1401 = ssub.s32 128, 128
          %1402 = vsyncadd %s1388, %s1401
          %s1403 = smul.addr %s36, 128
          %s1404 = scalar_lea.hbm %s8, %s1403
          %s1406 = sshll.u32 %s1391, 4
          %s1407 = int_to_ptr.vmem [resolvable:$true] %s1406
          %1409 = dma.vmem_to_hbm [thread:$0]  %s1407, 128, %s1404, %s1388
        $region88: #{tpu_custom_call.1} parent=51 // pred_fallthru
          _
        // Predicated region
        $region89: #{tpu_custom_call.1} parent=51 // pred_check
          %p1410 = pneg %p258
        $region90: #{tpu_custom_call.1} parent=51 // pred_check_branch
          %1412 = sbr.rel (%p1410) target = $region92
        $region91: #{tpu_custom_call.1} parent=51 // pred_region
          %s1414 = ssub.s32 128, 128
          %1415 = vsyncadd %s1393, %s1414
          %s1416 = smul.addr %s36, 128
          %s1417 = scalar_lea.hbm %s9, %s1416
          %s1419 = sshll.u32 %s1396, 4
          %s1420 = int_to_ptr.vmem [resolvable:$true] %s1419
          %1422 = dma.vmem_to_hbm [thread:$0]  %s1420, 128, %s1417, %s1393
        $region92: #{tpu_custom_call.1} parent=51 // pred_fallthru
          _
      $region52: #{tpu_custom_call.1} parent=5 // pred_fallthru
        _
      %p1423 = scmp.le.s32.totalorder 2, %s31
      // Predicated region
      $region93: #{tpu_custom_call.1} parent=5 // pred_check
        %p1424 = pneg %p1423
      $region94: #{tpu_custom_call.1} parent=5 // pred_check_branch
        %1426 = sbr.rel (%p1424) target = $region96
      $region95: #{tpu_custom_call.1} parent=5 // pred_region
        %s1427 = ssub.s32 %s31, 2
        // Predicated region
        $region97: #{tpu_custom_call.1} parent=95 // pred_check
          %p1428 = pneg %p238
        $region98: #{tpu_custom_call.1} parent=95 // pred_check_branch
          %1430 = sbr.rel (%p1428) target = $region100
        $region99: #{tpu_custom_call.1} parent=95 // pred_region
          %s1431 = sand.u32 %s223, 1
          %s1432 = scalar_lea.sflag [#allocation5], %s1431
          %s1433 = sand.u32 %s223, 1
          %s1434 = smul.addr %s1433, 8
          %s1435 = scalar_lea.vmem [#allocation17], %s1434
          %1436 = dma.done %s1432, 128
        $region100: #{tpu_custom_call.1} parent=95 // pred_fallthru
          _
        // Predicated region
        $region101: #{tpu_custom_call.1} parent=95 // pred_check
          %p1437 = pneg %p264
        $region102: #{tpu_custom_call.1} parent=95 // pred_check_branch
          %1439 = sbr.rel (%p1437) target = $region104
        $region103: #{tpu_custom_call.1} parent=95 // pred_region
          %s1440 = sand.u32 %s249, 1
          %s1441 = scalar_lea.sflag [#allocation19], %s1440
          %s1442 = sand.u32 %s249, 1
          %s1443 = smul.addr %s1442, 8
          %s1444 = scalar_lea.vmem [#allocation18], %s1443
          %1445 = dma.done %s1441, 128
        $region104: #{tpu_custom_call.1} parent=95 // pred_fallthru
          _
      $region96: #{tpu_custom_call.1} parent=5 // pred_fallthru
        _
    $region6: #{tpu_custom_call.1} parent=1 // loop_footer
      %s35 = sadd.s32 1, %s31
    $region7: #{tpu_custom_call.1} parent=1 // loop_footer_branch
      %30 = sbr.rel target = $region3
    $region8: #{tpu_custom_call.1} parent=1 // loop_exit
      _
    %1446 = vsyncpa [#allocation4], 1
    %s1447 = scalar_lea.sflag [#allocation4], 1
    %1448 = vsyncpa %s1447, 1
    %1449 = vsyncpa [#allocation7], 1
    %s1450 = scalar_lea.sflag [#allocation7], 1
    %1451 = vsyncpa %s1450, 1
    %1452 = vsyncpa [#allocation10], 1
    %1453 = vsyncpa [#allocation13], 1
    %1454 = vsyncpa [#allocation16], 1
    %1455 = vsyncpa [#allocation5], 1
    %s1456 = scalar_lea.sflag [#allocation5], 1
    %1457 = vsyncpa %s1456, 1
    %1458 = vsyncpa [#allocation19], 1
    %s1459 = scalar_lea.sflag [#allocation19], 1
    %1460 = vsyncpa %s1459, 1

</llo_original>
